<compile_context>
chip_gen: v7x
topology: tpu7x:2x2x1
jax: 0.10.0
libtpu: 0.0.40
codegen_flags: <defaults>
</compile_context>

<pallas_src>
import numpy as np
import jax
import jax.numpy as jnp
from jax.experimental import pallas as pl
from jax.experimental.pallas import tpu as pltpu

EPS = 1e-12

# ---- model / problem sizes (consistent with DKVMN_CORE.__init__) ----
NUM_C = 12        # num_c
NUM_Q = 16        # num_q
DIM_S = 32        # dim_s
SIZE_M = 8        # size_m (memory slots)
B = 2             # batch
LSEQ = 7          # length of qseqs / shft_qseqs / smasks
LC = LSEQ + 1     # length of cq / cc / cr (first step + shifted seq)
KSKILL = 3        # concept slots per interaction (multi-skill, -1 padded)
R = B * LC        # folded rows, TIME-MAJOR ordering: row = t * B + b


# ----------------------------- Pallas kernel -----------------------------
def dkvmn_kernel(x_ref, cr_ref, wbig_ref, bbig_ref, w4_ref, b4_ref,
                 wpt_ref, bp_ref, mv0_ref, out_ref,
                 decay_scr, add_scr, read_scr):
    f32 = jnp.float32
    D, M = DIM_S, SIZE_M

    x = x_ref[...]                                   # (R, 2D)
    cr = cr_ref[...]                                 # (R, 1) float response

    # --- single fused feed-forward matmul over x (all x-dependent heads)
    ybig = jnp.dot(x, wbig_ref[...], preferred_element_type=f32) + bbig_ref[...]

    # response blend; bias is baked into BOTH halves so it carries through.
    y2 = cr * ybig[:, 0:2 * D] + (1.0 - cr) * ybig[:, 2 * D:4 * D]   # (R, 2D)
    e = jax.nn.sigmoid(y2[:, :D])                    # erase gate    (R, D)
    a = jnp.tanh(y2[:, D:])                          # add gate      (R, D)

    k_fk = ybig[:, 4 * D:5 * D]                      # k @ Wf_k      (R, D)
    w_logits = ybig[:, 5 * D:5 * D + M]              # k @ Mk^T      (R, M)
    q_logit = ybig[:, 5 * D + M:5 * D + M + 2]       # (R, 2)
    qz = ybig[:, 5 * D + M + 2:5 * D + M + 4]        # q_logit + 2*constant

    # attention over memory slots; reciprocal goes to the (idle) EUP slot.
    # NOTE: approx=True trades ~2^-12 relative error for latency; use exact
    # division if bit-level parity with the torch reference is required.
    w_logits = w_logits - jnp.max(w_logits, axis=-1, keepdims=True)
    w_exp = jnp.exp(w_logits)
    w = w_exp * pl.reciprocal(jnp.sum(w_exp, axis=-1, keepdims=True), approx=True)

    # --- precompute everything that does NOT depend on Mv (off the serial
    # chain): per-row (M, D) decay / add outer products, staged in VMEM.
    decay_scr[...] = 1.0 - w[:, :, None] * e[:, None, :]     # (R, M, D)
    add_scr[...] = w[:, :, None] * a[:, None, :]             # (R, M, D)

    # --- serial DKVMN recurrence: only LC steps, both batch elements per
    # step; the dependent chain per step is just mul + add on (B, M, D).
    mv = jnp.broadcast_to(mv0_ref[...][None, :, :], (B, M, D))   # (B, M, D)
    for t in range(LC):
        r0 = t * B
        w_t = w[r0:r0 + B]                                        # (B, M)
        # read uses Mv BEFORE the update (== Mv[:, :-1] in the torch code);
        # it branches off the chain and its store lands in the idle vst slot.
        read_scr[r0:r0 + B, :] = jnp.sum(w_t[:, :, None] * mv, axis=1)
        mv = mv * decay_scr[r0:r0 + B] + add_scr[r0:r0 + B]

    read = read_scr[...]                                          # (R, D)

    # --- tail matmul over read: [Wf_r | Ws]
    y4 = jnp.dot(read, w4_ref[...], preferred_element_type=f32) + b4_ref[...]
    # TODO(synk): dropout_layer treated as identity (inference / eval mode).
    f = jnp.tanh(y4[:, :D] + k_fk)                   # f_layer([read, k])
    s_logit = y4[:, D:]

    # p head on VPU/XLU: an MXU pass at the very tail would be pure
    # issue + result-drain latency at (16,32)x(32,2).
    p0 = jnp.sum(f * wpt_ref[0:1, :], axis=-1, keepdims=True)
    p1 = jnp.sum(f * wpt_ref[1:2, :], axis=-1, keepdims=True)
    p = jnp.concatenate([p0, p1], axis=-1) + bp_ref[...]          # (R, 2)

    # fusion_mode == 'sum'
    z_qks = jnp.log(jax.nn.sigmoid(p + q_logit + s_logit) + EPS)
    z_q = jnp.log(jax.nn.sigmoid(qz) + EPS)    # k/s factors replaced by constant

    # direct lane-slice stores (no final concatenate)
    out_ref[:, 0:2] = z_qks
    out_ref[:, 2:4] = z_q
    out_ref[:, 4:6] = q_logit
    out_ref[:, 6:8] = s_logit


def dkvmn_core_pallas(x, cr_f, packed):
    """x: (B, LC, 2D) f32, cr_f: (B, LC, 1) f32, packed: packed weights."""
    # fold batch into rows TIME-MAJOR (t, b) so the recurrence can update both
    # batch elements' memories in the same vregs each step.
    x2 = jnp.transpose(x, (1, 0, 2)).reshape(R, 2 * DIM_S).astype(jnp.float32)
    cr2 = jnp.transpose(cr_f, (1, 0, 2)).reshape(R, 1).astype(jnp.float32)
    n_in = 2 + len(packed)

    out = pl.pallas_call(
        dkvmn_kernel,
        out_shape=jax.ShapeDtypeStruct((R, 8), jnp.float32),
        in_specs=[pl.BlockSpec(memory_space=pltpu.MemorySpace.VMEM)
                  for _ in range(n_in)],
        out_specs=pl.BlockSpec(memory_space=pltpu.MemorySpace.VMEM),
        scratch_shapes=[pltpu.VMEM((R, SIZE_M, DIM_S), jnp.float32),  # decay
                        pltpu.VMEM((R, SIZE_M, DIM_S), jnp.float32),  # add
                        pltpu.VMEM((R, DIM_S), jnp.float32)],         # reads
    )(x2, cr2, *packed)

    out = out.reshape(LC, B, 8).transpose(1, 0, 2)   # back to (B, LC, 8)
    z_qks = out[..., 0:2]
    z_q = out[..., 2:4]
    q_logit = out[..., 4:6]
    s_logit = out[..., 6:8]
    return z_qks, z_q, q_logit, s_logit


# ----------------------------- parameter init + packing -----------------------------
def linear_params(key, fan_in, fan_out):
    kw, kb = jax.random.split(key)
    bound = 1.0 / np.sqrt(fan_in)
    W = jax.random.uniform(kw, (fan_in, fan_out), jnp.float32, -bound, bound)
    b = jax.random.uniform(kb, (1, fan_out), jnp.float32, -bound, bound)
    return W, b


def init_params(key):
    keys = jax.random.split(key, 12)
    D, M = DIM_S, SIZE_M
    Wk, bk = linear_params(keys[0], 2 * D, D)      # k_emb_layer
    Wv, bv = linear_params(keys[1], 4 * D, D)      # v_emb_layer
    We, be = linear_params(keys[2], D, D)          # e_layer
    Wa, ba = linear_params(keys[3], D, D)          # a_layer
    Wf, bf = linear_params(keys[4], 2 * D, D)      # f_layer
    Wp, bp = linear_params(keys[5], D, 2)          # p_layer
    Wq, bq = linear_params(keys[6], D, 2)          # q_predict_linear
    Ws, bs = linear_params(keys[7], D, 2)          # s_predict_linear
    Mk = jax.random.normal(keys[8], (M, D), jnp.float32) * np.sqrt(2.0 / D)
    Mv0 = jax.random.normal(keys[9], (M, D), jnp.float32) * np.sqrt(2.0 / D)
    c_emb = jax.random.normal(keys[10], (NUM_C + 1, D), jnp.float32)
    c_emb = c_emb.at[0].set(0.0)                   # padding_idx=0
    q_emb = jax.random.normal(keys[11], (NUM_Q, D), jnp.float32)
    constant = jnp.float32(0.0)                    # nn.Parameter(0.0)

    # ---- host-side folding: fuse the whole x-dependent feed-forward ----
    # e/a gate inputs as a direct linear function of x (cr blend in-kernel):
    #   y2 = cr*(x@A_t + b2p) + (1-cr)*(x@A_f + b2p),  A_* = Wv_* @ [We|Wa]
    W2 = jnp.concatenate([We, Wa], axis=1)                 # (D, 2D)
    b2 = jnp.concatenate([be, ba], axis=1)                 # (1, 2D)
    A_t = Wv[:2 * D] @ W2                                  # (2D, 2D)
    A_f = Wv[2 * D:] @ W2                                  # (2D, 2D)
    b2p = bv @ W2 + b2                                     # (1, 2D)
    # all k-dependent heads folded through Wk:
    #   y3 = x @ (Wk@W3) + (bk@W3 + b3),  W3 = [Wf_k | Mk^T | Wq | Wq]
    W3 = jnp.concatenate([Wf[D:], Mk.T, Wq, Wq], axis=1)   # (D, D+M+4)
    b3 = jnp.concatenate([jnp.zeros((1, D), jnp.float32),
                          jnp.zeros((1, M), jnp.float32),
                          bq, bq + 2.0 * constant], axis=1)
    WkW3 = Wk @ W3                                         # (2D, D+M+4)
    b3p = bk @ W3 + b3
    # single big fused weight, lane-aligned blocks at 0 / 64 / 128:
    Wbig = jnp.concatenate([A_t, A_f, WkW3], axis=1)       # (2D, 172)
    bbig = jnp.concatenate([b2p, b2p, b3p], axis=1)        # (1, 172)
    # tail matmul over read: [Wf_r | Ws]
    W4 = jnp.concatenate([Wf[:D], Ws], axis=1)             # (D, D+2)
    b4 = jnp.concatenate([bf, bs], axis=1)
    WpT = Wp.T                                             # (2, D) for VPU p head

    packed = [Wbig, bbig, W4, b4, WpT, bp, Mv0]
    return packed, c_emb, q_emb


# ----------------------------- forward (glue + kernel) -----------------------------
def dkvmn_core_forward(data, packed_weights, c_emb_table, q_emb_table):
    q, c, r = data["qseqs"], data["cseqs"], data["rseqs"]
    qshft, cshft, rshft = data["shft_qseqs"], data["shft_cseqs"], data["shft_rseqs"]
    sm = data["smasks"]

    cq = jnp.concatenate([q[:, 0:1], qshft], axis=1)              # (B, LC)
    cc = jnp.concatenate([c[:, 0:1, :], cshft], axis=1)           # (B, LC, K)
    cr = jnp.concatenate([r[:, 0:1], rshft], axis=1)              # (B, LC)

    q_emb = q_emb_table[cq]                                       # (B, LC, D)
    # multi_skills_embedding
    emb_sum = c_emb_table[cc + 1].sum(-2)                         # (B, LC, D)
    cnum = jnp.where(cc < 0, 0, 1).sum(-1, keepdims=True)
    cnum = jnp.where(cnum == 0, 1, cnum)
    c_emb = emb_sum / cnum

    x = jnp.concatenate([q_emb, c_emb], axis=-1)                  # (B, LC, 2D)
    cr_f = cr[..., None].astype(jnp.float32)                      # (B, LC, 1)

    z_qks, z_q, q_logit, s_logit = dkvmn_core_pallas(
        x.astype(jnp.float32), cr_f, packed_weights)
    jax.block_until_ready((z_qks, z_q, q_logit, s_logit))

    # ----- masked-select / loss glue (plain numpy, matches torch semantics) -----
    # NOTE: end-to-end time is dominated by this host glue, not the kernel.
    z_nde = z_q                                                   # detach -> same values
    core = z_qks - z_q

    sm_np = np.asarray(sm).astype(bool)

    def msel(arr):  # arr: (B, LC, 2)  ->  (N, 2)
        return np.asarray(arr)[:, 1:, :][sm_np]

    z_nde_pred = msel(z_nde)
    q_pred = msel(q_logit)
    _s_pred = msel(s_logit)
    z_qks_pred = msel(z_qks)
    core_pred = msel(core)
    q_sel = np.asarray(qshft)[sm_np]
    t_sel = np.asarray(rshft)[sm_np].astype(np.int64)

    def log_softmax(v):
        m = v.max(axis=-1, keepdims=True)
        s = v - m
        return s - np.log(np.exp(s).sum(axis=-1, keepdims=True))

    def softmax(v):
        return np.exp(log_softmax(v))

    def cross_entropy(pred, tgt):
        return -log_softmax(pred)[np.arange(pred.shape[0]), tgt].mean()

    loss_cls = cross_entropy(q_pred, t_sel) + cross_entropy(z_qks_pred, t_sel)
    p_te = softmax(z_qks_pred)
    loss_kl = (-p_te * log_softmax(z_nde_pred)).sum(1).mean()
    loss = loss_cls + loss_kl

    return loss, softmax(core_pred)[:, 1], t_sel, q_sel + NUM_Q * t_sel


# ----------------------------- main -----------------------------
if __name__ == "__main__":
    root = jax.random.PRNGKey(0)
    k_params, k_data = jax.random.split(root)

    packed_weights, c_emb_table, q_emb_table = init_params(k_params)

    dk = jax.random.split(k_data, 8)
    qseqs = jax.random.randint(dk[0], (B, LSEQ), 0, NUM_Q)
    shft_qseqs = jax.random.randint(dk[1], (B, LSEQ), 0, NUM_Q)
    cseqs = jax.random.randint(dk[2], (B, LSEQ, KSKILL), 0, NUM_C)
    shft_cseqs = jax.random.randint(dk[3], (B, LSEQ, KSKILL), 0, NUM_C)
    # pad some concept slots with -1 (multi-skill padding)
    pad_mask = jax.random.bernoulli(dk[4], 0.3, (B, LSEQ, KSKILL))
    cseqs = jnp.where(pad_mask, -1, cseqs)
    shft_cseqs = jnp.where(pad_mask, -1, shft_cseqs)
    rseqs = jax.random.randint(dk[5], (B, LSEQ), 0, 2)
    shft_rseqs = jax.random.randint(dk[6], (B, LSEQ), 0, 2)
    tseqs = jnp.zeros((B, LSEQ), jnp.int32)
    masks = jnp.ones((B, LSEQ), bool)
    smasks = jnp.ones((B, LSEQ), bool).at[:, -1].set(False)

    data = {
        "qseqs": qseqs, "cseqs": cseqs, "rseqs": rseqs, "tseqs": tseqs,
        "shft_qseqs": shft_qseqs, "shft_cseqs": shft_cseqs,
        "shft_rseqs": shft_rseqs, "shft_tseqs": tseqs,
        "masks": masks, "smasks": smasks,
    }

    loss, pred, t_sel, qt = dkvmn_core_forward(
        data, packed_weights, c_emb_table, q_emb_table)

    assert np.isfinite(loss), "loss is not finite"
    assert pred.shape == (int(np.asarray(smasks).sum()),)
    print("KERNEL_OK")
</pallas_src>

<mosaic_0001>
module attributes {stable_mosaic.version = 11 : i64} {
  func.func @dkvmn_kernel(%arg0: memref<16x64xf32, #tpu.memory_space<vmem>>, %arg1: memref<16x1xf32, #tpu.memory_space<vmem>>, %arg2: memref<64x172xf32, #tpu.memory_space<vmem>>, %arg3: memref<1x172xf32, #tpu.memory_space<vmem>>, %arg4: memref<32x34xf32, #tpu.memory_space<vmem>>, %arg5: memref<1x34xf32, #tpu.memory_space<vmem>>, %arg6: memref<2x32xf32, #tpu.memory_space<vmem>>, %arg7: memref<1x2xf32, #tpu.memory_space<vmem>>, %arg8: memref<8x32xf32, #tpu.memory_space<vmem>>, %arg9: memref<16x8xf32, #tpu.memory_space<vmem>>, %arg10: memref<16x8x32xf32, #tpu.memory_space<vmem>>, %arg11: memref<16x8x32xf32, #tpu.memory_space<vmem>>, %arg12: memref<16x32xf32, #tpu.memory_space<vmem>>) attributes {dimension_semantics = [], scalar_prefetch = 0 : i64, scratch_operands = 3 : i64, tpu.core_type = #tpu.core_type<tc>} {
    %c0 = arith.constant 0 : index
    %c0_0 = arith.constant 0 : index
    %0 = vector.load %arg0[%c0, %c0_0] : memref<16x64xf32, #tpu.memory_space<vmem>>, vector<16x64xf32>
    %c0_1 = arith.constant 0 : index
    %c0_2 = arith.constant 0 : index
    %1 = vector.load %arg1[%c0_1, %c0_2] : memref<16x1xf32, #tpu.memory_space<vmem>>, vector<16x1xf32>
    %c0_3 = arith.constant 0 : index
    %c0_4 = arith.constant 0 : index
    %2 = vector.load %arg2[%c0_3, %c0_4] : memref<64x172xf32, #tpu.memory_space<vmem>>, vector<64x172xf32>
    %cst = arith.constant dense<0.000000e+00> : vector<16x172xf32>
    %3 = tpu.matmul %0, %2, %cst {dimension_numbers = #tpu.dot_dimension_numbers<[1], [0], [0], [1], [0, 0, 1, 1], [], []>} : vector<16x64xf32>, vector<64x172xf32>, vector<16x172xf32> -> vector<16x172xf32>
    %c0_5 = arith.constant 0 : index
    %c0_6 = arith.constant 0 : index
    %4 = vector.load %arg3[%c0_5, %c0_6] : memref<1x172xf32, #tpu.memory_space<vmem>>, vector<1x172xf32>
    %5 = vector.broadcast %4 : vector<1x172xf32> to vector<16x172xf32>
    %6 = arith.addf %3, %5 : vector<16x172xf32>
    %7 = vector.extract_strided_slice %6 {offsets = [0, 0], sizes = [16, 64], strides = [1, 1]} : vector<16x172xf32> to vector<16x64xf32>
    %8 = vector.broadcast %1 : vector<16x1xf32> to vector<16x64xf32>
    %9 = arith.mulf %8, %7 : vector<16x64xf32>
    %cst_7 = arith.constant 1.000000e+00 : f32
    %10 = vector.broadcast %cst_7 : f32 to vector<16x1xf32>
    %11 = arith.subf %10, %1 : vector<16x1xf32>
    %12 = vector.extract_strided_slice %6 {offsets = [0, 64], sizes = [16, 64], strides = [1, 1]} : vector<16x172xf32> to vector<16x64xf32>
    %13 = vector.broadcast %11 : vector<16x1xf32> to vector<16x64xf32>
    %14 = arith.mulf %13, %12 : vector<16x64xf32>
    %15 = arith.addf %9, %14 : vector<16x64xf32>
    %16 = vector.extract_strided_slice %15 {offsets = [0, 0], sizes = [16, 32], strides = [1, 1]} : vector<16x64xf32> to vector<16x32xf32>
    %17 = arith.negf %16 : vector<16x32xf32>
    %18 = math.exp %17 : vector<16x32xf32>
    %cst_8 = arith.constant 1.000000e+00 : f32
    %19 = vector.broadcast %cst_8 : f32 to vector<16x32xf32>
    %20 = arith.addf %19, %18 : vector<16x32xf32>
    %21 = arith.divf %19, %20 : vector<16x32xf32>
    %22 = vector.extract_strided_slice %15 {offsets = [0, 32], sizes = [16, 32], strides = [1, 1]} : vector<16x64xf32> to vector<16x32xf32>
    %23 = math.tanh %22 : vector<16x32xf32>
    %24 = vector.extract_strided_slice %6 {offsets = [0, 128], sizes = [16, 32], strides = [1, 1]} : vector<16x172xf32> to vector<16x32xf32>
    %25 = vector.extract_strided_slice %6 {offsets = [0, 160], sizes = [16, 8], strides = [1, 1]} : vector<16x172xf32> to vector<16x8xf32>
    %26 = vector.extract_strided_slice %6 {offsets = [0, 168], sizes = [16, 2], strides = [1, 1]} : vector<16x172xf32> to vector<16x2xf32>
    %27 = vector.extract_strided_slice %6 {offsets = [0, 170], sizes = [16, 2], strides = [1, 1]} : vector<16x172xf32> to vector<16x2xf32>
    %cst_9 = arith.constant dense<0xFF800000> : vector<16xf32>
    %28 = vector.multi_reduction <maximumf>, %25, %cst_9 [1] : vector<16x8xf32> to vector<16xf32>
    %29 = vector.shape_cast %28 : vector<16xf32> to vector<16x1xf32>
    %30 = vector.broadcast %29 : vector<16x1xf32> to vector<16x8xf32>
    %31 = arith.subf %25, %30 : vector<16x8xf32>
    %32 = math.exp %31 : vector<16x8xf32>
    %cst_10 = arith.constant dense<0.000000e+00> : vector<16xf32>
    %33 = vector.multi_reduction <add>, %32, %cst_10 [1] : vector<16x8xf32> to vector<16xf32>
    %34 = vector.shape_cast %33 : vector<16xf32> to vector<16x1xf32>
    %35 = tpu.reciprocal %34 {approx = true} : vector<16x1xf32> -> vector<16x1xf32>
    %36 = vector.broadcast %35 : vector<16x1xf32> to vector<16x8xf32>
    %37 = arith.mulf %32, %36 : vector<16x8xf32>
    %38 = vector.shape_cast %37 : vector<16x8xf32> to vector<16x8x1xf32>
    %39 = vector.shape_cast %21 : vector<16x32xf32> to vector<16x1x32xf32>
    %40 = vector.broadcast %38 : vector<16x8x1xf32> to vector<16x8x32xf32>
    %41 = vector.broadcast %39 : vector<16x1x32xf32> to vector<16x8x32xf32>
    %42 = arith.mulf %40, %41 : vector<16x8x32xf32>
    %cst_11 = arith.constant 1.000000e+00 : f32
    %43 = vector.broadcast %cst_11 : f32 to vector<16x8x32xf32>
    %44 = arith.subf %43, %42 : vector<16x8x32xf32>
    %c0_12 = arith.constant 0 : index
    %c0_13 = arith.constant 0 : index
    %c0_14 = arith.constant 0 : index
    %45 = vector.load %arg10[%c0_12, %c0_13, %c0_14] : memref<16x8x32xf32, #tpu.memory_space<vmem>>, vector<16x8x32xf32>
    tpu.vector_store %arg10[%c0_12, %c0_13, %c0_14], %44 {strides = array<i32>} : memref<16x8x32xf32, #tpu.memory_space<vmem>>, vector<16x8x32xf32>,
    %46 = vector.shape_cast %37 : vector<16x8xf32> to vector<16x8x1xf32>
    %47 = vector.shape_cast %23 : vector<16x32xf32> to vector<16x1x32xf32>
    %48 = vector.broadcast %46 : vector<16x8x1xf32> to vector<16x8x32xf32>
    %49 = vector.broadcast %47 : vector<16x1x32xf32> to vector<16x8x32xf32>
    %50 = arith.mulf %48, %49 : vector<16x8x32xf32>
    %c0_15 = arith.constant 0 : index
    %c0_16 = arith.constant 0 : index
    %c0_17 = arith.constant 0 : index
    %51 = vector.load %arg11[%c0_15, %c0_16, %c0_17] : memref<16x8x32xf32, #tpu.memory_space<vmem>>, vector<16x8x32xf32>
    tpu.vector_store %arg11[%c0_15, %c0_16, %c0_17], %50 {strides = array<i32>} : memref<16x8x32xf32, #tpu.memory_space<vmem>>, vector<16x8x32xf32>,
    %c0_18 = arith.constant 0 : index
    %c0_19 = arith.constant 0 : index
    %52 = vector.load %arg8[%c0_18, %c0_19] : memref<8x32xf32, #tpu.memory_space<vmem>>, vector<8x32xf32>
    %53 = vector.shape_cast %52 : vector<8x32xf32> to vector<1x8x32xf32>
    %54 = vector.shape_cast %53 : vector<1x8x32xf32> to vector<1x8x32xf32>
    %55 = vector.broadcast %54 : vector<1x8x32xf32> to vector<2x8x32xf32>
    %56 = vector.extract_strided_slice %37 {offsets = [0, 0], sizes = [2, 8], strides = [1, 1]} : vector<16x8xf32> to vector<2x8xf32>
    %57 = vector.shape_cast %56 : vector<2x8xf32> to vector<2x8x1xf32>
    %58 = vector.broadcast %57 : vector<2x8x1xf32> to vector<2x8x32xf32>
    %59 = arith.mulf %58, %55 : vector<2x8x32xf32>
    %cst_20 = arith.constant dense<0.000000e+00> : vector<2x32xf32>
    %60 = vector.multi_reduction <add>, %59, %cst_20 [1] : vector<2x8x32xf32> to vector<2x32xf32>
    %c0_21 = arith.constant 0 : index
    %c0_22 = arith.constant 0 : index
    %61 = vector.load %arg12[%c0_21, %c0_22] : memref<16x32xf32, #tpu.memory_space<vmem>>, vector<2x32xf32>
    tpu.vector_store %arg12[%c0_21, %c0_22], %60 {strides = array<i32>} : memref<16x32xf32, #tpu.memory_space<vmem>>, vector<2x32xf32>,
    %c0_23 = arith.constant 0 : index
    %c0_24 = arith.constant 0 : index
    %c0_25 = arith.constant 0 : index
    %62 = vector.load %arg10[%c0_23, %c0_24, %c0_25] : memref<16x8x32xf32, #tpu.memory_space<vmem>>, vector<2x8x32xf32>
    %63 = arith.mulf %55, %62 : vector<2x8x32xf32>
    %c0_26 = arith.constant 0 : index
    %c0_27 = arith.constant 0 : index
    %c0_28 = arith.constant 0 : index
    %64 = vector.load %arg11[%c0_26, %c0_27, %c0_28] : memref<16x8x32xf32, #tpu.memory_space<vmem>>, vector<2x8x32xf32>
    %65 = arith.addf %63, %64 : vector<2x8x32xf32>
    %66 = vector.extract_strided_slice %37 {offsets = [2, 0], sizes = [2, 8], strides = [1, 1]} : vector<16x8xf32> to vector<2x8xf32>
    %67 = vector.shape_cast %66 : vector<2x8xf32> to vector<2x8x1xf32>
    %68 = vector.broadcast %67 : vector<2x8x1xf32> to vector<2x8x32xf32>
    %69 = arith.mulf %68, %65 : vector<2x8x32xf32>
    %cst_29 = arith.constant dense<0.000000e+00> : vector<2x32xf32>
    %70 = vector.multi_reduction <add>, %69, %cst_29 [1] : vector<2x8x32xf32> to vector<2x32xf32>
    %c2 = arith.constant 2 : index
    %c0_30 = arith.constant 0 : index
    %71 = vector.load %arg12[%c2, %c0_30] : memref<16x32xf32, #tpu.memory_space<vmem>>, vector<2x32xf32>
    tpu.vector_store %arg12[%c2, %c0_30], %70 {strides = array<i32>} : memref<16x32xf32, #tpu.memory_space<vmem>>, vector<2x32xf32>,
    %c2_31 = arith.constant 2 : index
    %c0_32 = arith.constant 0 : index
    %c0_33 = arith.constant 0 : index
    %72 = vector.load %arg10[%c2_31, %c0_32, %c0_33] : memref<16x8x32xf32, #tpu.memory_space<vmem>>, vector<2x8x32xf32>
    %73 = arith.mulf %65, %72 : vector<2x8x32xf32>
    %c2_34 = arith.constant 2 : index
    %c0_35 = arith.constant 0 : index
    %c0_36 = arith.constant 0 : index
    %74 = vector.load %arg11[%c2_34, %c0_35, %c0_36] : memref<16x8x32xf32, #tpu.memory_space<vmem>>, vector<2x8x32xf32>
    %75 = arith.addf %73, %74 : vector<2x8x32xf32>
    %76 = vector.extract_strided_slice %37 {offsets = [4, 0], sizes = [2, 8], strides = [1, 1]} : vector<16x8xf32> to vector<2x8xf32>
    %77 = vector.shape_cast %76 : vector<2x8xf32> to vector<2x8x1xf32>
    %78 = vector.broadcast %77 : vector<2x8x1xf32> to vector<2x8x32xf32>
    %79 = arith.mulf %78, %75 : vector<2x8x32xf32>
    %cst_37 = arith.constant dense<0.000000e+00> : vector<2x32xf32>
    %80 = vector.multi_reduction <add>, %79, %cst_37 [1] : vector<2x8x32xf32> to vector<2x32xf32>
    %c4 = arith.constant 4 : index
    %c0_38 = arith.constant 0 : index
    %81 = vector.load %arg12[%c4, %c0_38] : memref<16x32xf32, #tpu.memory_space<vmem>>, vector<2x32xf32>
    tpu.vector_store %arg12[%c4, %c0_38], %80 {strides = array<i32>} : memref<16x32xf32, #tpu.memory_space<vmem>>, vector<2x32xf32>,
    %c4_39 = arith.constant 4 : index
    %c0_40 = arith.constant 0 : index
    %c0_41 = arith.constant 0 : index
    %82 = vector.load %arg10[%c4_39, %c0_40, %c0_41] : memref<16x8x32xf32, #tpu.memory_space<vmem>>, vector<2x8x32xf32>
    %83 = arith.mulf %75, %82 : vector<2x8x32xf32>
    %c4_42 = arith.constant 4 : index
    %c0_43 = arith.constant 0 : index
    %c0_44 = arith.constant 0 : index
    %84 = vector.load %arg11[%c4_42, %c0_43, %c0_44] : memref<16x8x32xf32, #tpu.memory_space<vmem>>, vector<2x8x32xf32>
    %85 = arith.addf %83, %84 : vector<2x8x32xf32>
    %86 = vector.extract_strided_slice %37 {offsets = [6, 0], sizes = [2, 8], strides = [1, 1]} : vector<16x8xf32> to vector<2x8xf32>
    %87 = vector.shape_cast %86 : vector<2x8xf32> to vector<2x8x1xf32>
    %88 = vector.broadcast %87 : vector<2x8x1xf32> to vector<2x8x32xf32>
    %89 = arith.mulf %88, %85 : vector<2x8x32xf32>
    %cst_45 = arith.constant dense<0.000000e+00> : vector<2x32xf32>
    %90 = vector.multi_reduction <add>, %89, %cst_45 [1] : vector<2x8x32xf32> to vector<2x32xf32>
    %c6 = arith.constant 6 : index
    %c0_46 = arith.constant 0 : index
    %91 = vector.load %arg12[%c6, %c0_46] : memref<16x32xf32, #tpu.memory_space<vmem>>, vector<2x32xf32>
    tpu.vector_store %arg12[%c6, %c0_46], %90 {strides = array<i32>} : memref<16x32xf32, #tpu.memory_space<vmem>>, vector<2x32xf32>,
    %c6_47 = arith.constant 6 : index
    %c0_48 = arith.constant 0 : index
    %c0_49 = arith.constant 0 : index
    %92 = vector.load %arg10[%c6_47, %c0_48, %c0_49] : memref<16x8x32xf32, #tpu.memory_space<vmem>>, vector<2x8x32xf32>
    %93 = arith.mulf %85, %92 : vector<2x8x32xf32>
    %c6_50 = arith.constant 6 : index
    %c0_51 = arith.constant 0 : index
    %c0_52 = arith.constant 0 : index
    %94 = vector.load %arg11[%c6_50, %c0_51, %c0_52] : memref<16x8x32xf32, #tpu.memory_space<vmem>>, vector<2x8x32xf32>
    %95 = arith.addf %93, %94 : vector<2x8x32xf32>
    %96 = vector.extract_strided_slice %37 {offsets = [8, 0], sizes = [2, 8], strides = [1, 1]} : vector<16x8xf32> to vector<2x8xf32>
    %97 = vector.shape_cast %96 : vector<2x8xf32> to vector<2x8x1xf32>
    %98 = vector.broadcast %97 : vector<2x8x1xf32> to vector<2x8x32xf32>
    %99 = arith.mulf %98, %95 : vector<2x8x32xf32>
    %cst_53 = arith.constant dense<0.000000e+00> : vector<2x32xf32>
    %100 = vector.multi_reduction <add>, %99, %cst_53 [1] : vector<2x8x32xf32> to vector<2x32xf32>
    %c8 = arith.constant 8 : index
    %c0_54 = arith.constant 0 : index
    %101 = vector.load %arg12[%c8, %c0_54] : memref<16x32xf32, #tpu.memory_space<vmem>>, vector<2x32xf32>
    tpu.vector_store %arg12[%c8, %c0_54], %100 {strides = array<i32>} : memref<16x32xf32, #tpu.memory_space<vmem>>, vector<2x32xf32>,
    %c8_55 = arith.constant 8 : index
    %c0_56 = arith.constant 0 : index
    %c0_57 = arith.constant 0 : index
    %102 = vector.load %arg10[%c8_55, %c0_56, %c0_57] : memref<16x8x32xf32, #tpu.memory_space<vmem>>, vector<2x8x32xf32>
    %103 = arith.mulf %95, %102 : vector<2x8x32xf32>
    %c8_58 = arith.constant 8 : index
    %c0_59 = arith.constant 0 : index
    %c0_60 = arith.constant 0 : index
    %104 = vector.load %arg11[%c8_58, %c0_59, %c0_60] : memref<16x8x32xf32, #tpu.memory_space<vmem>>, vector<2x8x32xf32>
    %105 = arith.addf %103, %104 : vector<2x8x32xf32>
    %106 = vector.extract_strided_slice %37 {offsets = [10, 0], sizes = [2, 8], strides = [1, 1]} : vector<16x8xf32> to vector<2x8xf32>
    %107 = vector.shape_cast %106 : vector<2x8xf32> to vector<2x8x1xf32>
    %108 = vector.broadcast %107 : vector<2x8x1xf32> to vector<2x8x32xf32>
    %109 = arith.mulf %108, %105 : vector<2x8x32xf32>
    %cst_61 = arith.constant dense<0.000000e+00> : vector<2x32xf32>
    %110 = vector.multi_reduction <add>, %109, %cst_61 [1] : vector<2x8x32xf32> to vector<2x32xf32>
    %c10 = arith.constant 10 : index
    %c0_62 = arith.constant 0 : index
    %111 = vector.load %arg12[%c10, %c0_62] : memref<16x32xf32, #tpu.memory_space<vmem>>, vector<2x32xf32>
    tpu.vector_store %arg12[%c10, %c0_62], %110 {strides = array<i32>} : memref<16x32xf32, #tpu.memory_space<vmem>>, vector<2x32xf32>,
    %c10_63 = arith.constant 10 : index
    %c0_64 = arith.constant 0 : index
    %c0_65 = arith.constant 0 : index
    %112 = vector.load %arg10[%c10_63, %c0_64, %c0_65] : memref<16x8x32xf32, #tpu.memory_space<vmem>>, vector<2x8x32xf32>
    %113 = arith.mulf %105, %112 : vector<2x8x32xf32>
    %c10_66 = arith.constant 10 : index
    %c0_67 = arith.constant 0 : index
    %c0_68 = arith.constant 0 : index
    %114 = vector.load %arg11[%c10_66, %c0_67, %c0_68] : memref<16x8x32xf32, #tpu.memory_space<vmem>>, vector<2x8x32xf32>
    %115 = arith.addf %113, %114 : vector<2x8x32xf32>
    %116 = vector.extract_strided_slice %37 {offsets = [12, 0], sizes = [2, 8], strides = [1, 1]} : vector<16x8xf32> to vector<2x8xf32>
    %117 = vector.shape_cast %116 : vector<2x8xf32> to vector<2x8x1xf32>
    %118 = vector.broadcast %117 : vector<2x8x1xf32> to vector<2x8x32xf32>
    %119 = arith.mulf %118, %115 : vector<2x8x32xf32>
    %cst_69 = arith.constant dense<0.000000e+00> : vector<2x32xf32>
    %120 = vector.multi_reduction <add>, %119, %cst_69 [1] : vector<2x8x32xf32> to vector<2x32xf32>
    %c12 = arith.constant 12 : index
    %c0_70 = arith.constant 0 : index
    %121 = vector.load %arg12[%c12, %c0_70] : memref<16x32xf32, #tpu.memory_space<vmem>>, vector<2x32xf32>
    tpu.vector_store %arg12[%c12, %c0_70], %120 {strides = array<i32>} : memref<16x32xf32, #tpu.memory_space<vmem>>, vector<2x32xf32>,
    %c12_71 = arith.constant 12 : index
    %c0_72 = arith.constant 0 : index
    %c0_73 = arith.constant 0 : index
    %122 = vector.load %arg10[%c12_71, %c0_72, %c0_73] : memref<16x8x32xf32, #tpu.memory_space<vmem>>, vector<2x8x32xf32>
    %123 = arith.mulf %115, %122 : vector<2x8x32xf32>
    %c12_74 = arith.constant 12 : index
    %c0_75 = arith.constant 0 : index
    %c0_76 = arith.constant 0 : index
    %124 = vector.load %arg11[%c12_74, %c0_75, %c0_76] : memref<16x8x32xf32, #tpu.memory_space<vmem>>, vector<2x8x32xf32>
    %125 = arith.addf %123, %124 : vector<2x8x32xf32>
    %126 = vector.extract_strided_slice %37 {offsets = [14, 0], sizes = [2, 8], strides = [1, 1]} : vector<16x8xf32> to vector<2x8xf32>
    %127 = vector.shape_cast %126 : vector<2x8xf32> to vector<2x8x1xf32>
    %128 = vector.broadcast %127 : vector<2x8x1xf32> to vector<2x8x32xf32>
    %129 = arith.mulf %128, %125 : vector<2x8x32xf32>
    %cst_77 = arith.constant dense<0.000000e+00> : vector<2x32xf32>
    %130 = vector.multi_reduction <add>, %129, %cst_77 [1] : vector<2x8x32xf32> to vector<2x32xf32>
    %c14 = arith.constant 14 : index
    %c0_78 = arith.constant 0 : index
    %131 = vector.load %arg12[%c14, %c0_78] : memref<16x32xf32, #tpu.memory_space<vmem>>, vector<2x32xf32>
    tpu.vector_store %arg12[%c14, %c0_78], %130 {strides = array<i32>} : memref<16x32xf32, #tpu.memory_space<vmem>>, vector<2x32xf32>,
    %c0_79 = arith.constant 0 : index
    %c0_80 = arith.constant 0 : index
    %132 = vector.load %arg12[%c0_79, %c0_80] : memref<16x32xf32, #tpu.memory_space<vmem>>, vector<16x32xf32>
    %c0_81 = arith.constant 0 : index
    %c0_82 = arith.constant 0 : index
    %133 = vector.load %arg4[%c0_81, %c0_82] : memref<32x34xf32, #tpu.memory_space<vmem>>, vector<32x34xf32>
    %cst_83 = arith.constant dense<0.000000e+00> : vector<16x34xf32>
    %134 = tpu.matmul %132, %133, %cst_83 {dimension_numbers = #tpu.dot_dimension_numbers<[1], [0], [0], [1], [0, 0, 1, 1], [], []>} : vector<16x32xf32>, vector<32x34xf32>, vector<16x34xf32> -> vector<16x34xf32>
    %c0_84 = arith.constant 0 : index
    %c0_85 = arith.constant 0 : index
    %135 = vector.load %arg5[%c0_84, %c0_85] : memref<1x34xf32, #tpu.memory_space<vmem>>, vector<1x34xf32>
    %136 = vector.broadcast %135 : vector<1x34xf32> to vector<16x34xf32>
    %137 = arith.addf %134, %136 : vector<16x34xf32>
    %138 = vector.extract_strided_slice %137 {offsets = [0, 0], sizes = [16, 32], strides = [1, 1]} : vector<16x34xf32> to vector<16x32xf32>
    %139 = arith.addf %138, %24 : vector<16x32xf32>
    %140 = math.tanh %139 : vector<16x32xf32>
    %141 = vector.extract_strided_slice %137 {offsets = [0, 32], sizes = [16, 2], strides = [1, 1]} : vector<16x34xf32> to vector<16x2xf32>
    %c0_86 = arith.constant 0 : index
    %c0_87 = arith.constant 0 : index
    %142 = vector.load %arg6[%c0_86, %c0_87] : memref<2x32xf32, #tpu.memory_space<vmem>>, vector<1x32xf32>
    %143 = vector.broadcast %142 : vector<1x32xf32> to vector<16x32xf32>
    %144 = arith.mulf %140, %143 : vector<16x32xf32>
    %cst_88 = arith.constant dense<0.000000e+00> : vector<16xf32>
    %145 = vector.multi_reduction <add>, %144, %cst_88 [1] : vector<16x32xf32> to vector<16xf32>
    %146 = vector.shape_cast %145 : vector<16xf32> to vector<16x1xf32>
    %c1 = arith.constant 1 : index
    %c0_89 = arith.constant 0 : index
    %147 = vector.load %arg6[%c1, %c0_89] : memref<2x32xf32, #tpu.memory_space<vmem>>, vector<1x32xf32>
    %148 = vector.broadcast %147 : vector<1x32xf32> to vector<16x32xf32>
    %149 = arith.mulf %140, %148 : vector<16x32xf32>
    %cst_90 = arith.constant dense<0.000000e+00> : vector<16xf32>
    %150 = vector.multi_reduction <add>, %149, %cst_90 [1] : vector<16x32xf32> to vector<16xf32>
    %151 = vector.shape_cast %150 : vector<16xf32> to vector<16x1xf32>
    %152 = tpu.concatenate %146, %151 in 1 : vector<16x1xf32>, vector<16x1xf32> -> vector<16x2xf32>
    %c0_91 = arith.constant 0 : index
    %c0_92 = arith.constant 0 : index
    %153 = vector.load %arg7[%c0_91, %c0_92] : memref<1x2xf32, #tpu.memory_space<vmem>>, vector<1x2xf32>
    %154 = vector.broadcast %153 : vector<1x2xf32> to vector<16x2xf32>
    %155 = arith.addf %152, %154 : vector<16x2xf32>
    %156 = arith.addf %155, %26 : vector<16x2xf32>
    %157 = arith.addf %156, %141 : vector<16x2xf32>
    %158 = arith.negf %157 : vector<16x2xf32>
    %159 = math.exp %158 : vector<16x2xf32>
    %cst_93 = arith.constant 1.000000e+00 : f32
    %160 = vector.broadcast %cst_93 : f32 to vector<16x2xf32>
    %161 = arith.addf %160, %159 : vector<16x2xf32>
    %162 = arith.divf %160, %161 : vector<16x2xf32>
    %cst_94 = arith.constant 9.99999996E-13 : f32
    %163 = vector.broadcast %cst_94 : f32 to vector<16x2xf32>
    %164 = arith.addf %162, %163 : vector<16x2xf32>
    %165 = math.log %164 : vector<16x2xf32>
    %166 = arith.negf %27 : vector<16x2xf32>
    %167 = math.exp %166 : vector<16x2xf32>
    %cst_95 = arith.constant 1.000000e+00 : f32
    %168 = vector.broadcast %cst_95 : f32 to vector<16x2xf32>
    %169 = arith.addf %168, %167 : vector<16x2xf32>
    %170 = arith.divf %168, %169 : vector<16x2xf32>
    %cst_96 = arith.constant 9.99999996E-13 : f32
    %171 = vector.broadcast %cst_96 : f32 to vector<16x2xf32>
    %172 = arith.addf %170, %171 : vector<16x2xf32>
    %173 = math.log %172 : vector<16x2xf32>
    %c0_97 = arith.constant 0 : index
    %c0_98 = arith.constant 0 : index
    %174 = vector.load %arg9[%c0_97, %c0_98] : memref<16x8xf32, #tpu.memory_space<vmem>>, vector<16x2xf32>
    tpu.vector_store %arg9[%c0_97, %c0_98], %165 {strides = array<i32>} : memref<16x8xf32, #tpu.memory_space<vmem>>, vector<16x2xf32>,
    %c0_99 = arith.constant 0 : index
    %c2_100 = arith.constant 2 : index
    %175 = vector.load %arg9[%c0_99, %c2_100] : memref<16x8xf32, #tpu.memory_space<vmem>>, vector<16x2xf32>
    tpu.vector_store %arg9[%c0_99, %c2_100], %173 {strides = array<i32>} : memref<16x8xf32, #tpu.memory_space<vmem>>, vector<16x2xf32>,
    %c0_101 = arith.constant 0 : index
    %c4_102 = arith.constant 4 : index
    %176 = vector.load %arg9[%c0_101, %c4_102] : memref<16x8xf32, #tpu.memory_space<vmem>>, vector<16x2xf32>
    tpu.vector_store %arg9[%c0_101, %c4_102], %26 {strides = array<i32>} : memref<16x8xf32, #tpu.memory_space<vmem>>, vector<16x2xf32>,
    %c0_103 = arith.constant 0 : index
    %c6_104 = arith.constant 6 : index
    %177 = vector.load %arg9[%c0_103, %c6_104] : memref<16x8xf32, #tpu.memory_space<vmem>>, vector<16x2xf32>
    tpu.vector_store %arg9[%c0_103, %c6_104], %141 {strides = array<i32>} : memref<16x8xf32, #tpu.memory_space<vmem>>, vector<16x2xf32>,
    return
  }
}

</mosaic_0001>

<llo_original>
// kernel: tpu_custom_call.1
$region0: #{tpu_custom_call.1}
  #allocation0 [shape = 'u32[]', space=smem, size = 0x4, offset = 0x4, fixed_abs, tag = 'smem constant byte address 0x4 - core index']
  #allocation1 [shape = 'u32[144,128]{1,0:T(1,128)}', space=vmem, size = 0x12000, scoped, tag = 'internal scratch']
  #allocation2 [shape = 'f32[16,8,32]{2,1,0:T(8,128)}', space=vmem, size = 0x10000, scoped, tag = 'scratch operand']
  #allocation3 [shape = 'f32[16,8,32]{2,1,0:T(8,128)}', space=vmem, size = 0x10000, scoped, tag = 'scratch operand']
  #allocation4 [shape = 'f32[16,32]{1,0:T(8,128)}', space=vmem, size = 0x2000, scoped, tag = 'scratch operand']
  %s0 = inlined_call_operand.hbm [shape: f32[16,64], index: 0, kind: input, shape index: {}]
  %s1 = inlined_call_operand.vmem [shape: f32[16,1], index: 1, kind: input, shape index: {}]
  %s2 = inlined_call_operand.hbm [shape: f32[64,172], index: 2, kind: input, shape index: {}]
  %s3 = inlined_call_operand.hbm [shape: f32[1,172], index: 3, kind: input, shape index: {}]
  %s4 = inlined_call_operand.vmem [shape: f32[32,34], index: 4, kind: input, shape index: {}]
  %s5 = inlined_call_operand.vmem [shape: f32[1,34], index: 5, kind: input, shape index: {}]
  %s6 = inlined_call_operand.vmem [shape: f32[2,32], index: 6, kind: input, shape index: {}]
  %s7 = inlined_call_operand.hbm [shape: f32[1,2], index: 7, kind: input, shape index: {}]
  %s8 = inlined_call_operand.vmem [shape: f32[8,32], index: 8, kind: input, shape index: {}]
  %s9 = inlined_call_operand.vmem [shape: f32[16,8], index: 9, kind: output, shape index: {}]
  %s10 = sld [smem:[#allocation0]]
  $region62: #{tpu_custom_call.1} parent=0
    _
  %s12 = ssub.s32 1, %s10
  %s13 = scalar_select 0, %s12, %s10
  $region1: #{tpu_custom_call.1} parent=0
    #allocation5 [shape = 'u8[8192]{0}', space=vmem, size = 0x2000, scoped, tag = 'input window, operand 0, single buffered']
    #allocation6 [shape = 's32[1]{0}', space=sflag, size = 0x4, scoped, tag = 'scoped memory for tpu_custom_call.1']
    #allocation7 [shape = 'u8[65536]{0}', space=vmem, size = 0x10000, scoped, tag = 'input window, operand 2, single buffered']
    #allocation8 [shape = 's32[1]{0}', space=sflag, size = 0x4, scoped, tag = 'scoped memory for tpu_custom_call.1']
    #allocation9 [shape = 'u8[1024]{0}', space=vmem, size = 0x400, scoped, tag = 'input window, operand 3, single buffered']
    #allocation10 [shape = 'u8[512]{0}', space=vmem, size = 0x400, scoped, tag = 'input window, operand 7, single buffered']
    #allocation11 [shape = 's32[1]{0}', space=sflag, size = 0x4, scoped, tag = 'scoped memory for tpu_custom_call.1']
    %14 = vsyncpa [#allocation6], 0
    %15 = vsyncpa [#allocation8], 0
    %16 = vsyncpa [#allocation11], 0
    // Predicated region
    $region2: #{tpu_custom_call.1} parent=1 // pred_check
      _
    $region3: #{tpu_custom_call.1} parent=1 // pred_check_branch
      %18 = sbr.rel (0) target = $region5
    $region4: #{tpu_custom_call.1} parent=1 // pred_region
      %s20 = ssub.s32 256, 256
      %21 = vsyncadd [#allocation6], %s20
      %s22 = sshll.u32 [#allocation5], 4
      %s23 = int_to_ptr.vmem [resolvable:$true] %s22
      %28 = dma.hbm_to_vmem [thread:$0]  %s0, 256, %s23, [#allocation6], 128, 128, 8
    $region5: #{tpu_custom_call.1} parent=1 // pred_fallthru
      _
    // Predicated region
    $region6: #{tpu_custom_call.1} parent=1 // pred_check
      _
    $region7: #{tpu_custom_call.1} parent=1 // pred_check_branch
      %30 = sbr.rel (0) target = $region9
    $region8: #{tpu_custom_call.1} parent=1 // pred_region
      _
    $region9: #{tpu_custom_call.1} parent=1 // pred_fallthru
      _
    // Predicated region
    $region10: #{tpu_custom_call.1} parent=1 // pred_check
      _
    $region11: #{tpu_custom_call.1} parent=1 // pred_check_branch
      %32 = sbr.rel (0) target = $region13
    $region12: #{tpu_custom_call.1} parent=1 // pred_region
      %s34 = ssub.s32 2048, 2048
      %35 = vsyncadd [#allocation8], %s34
      %s36 = sshll.u32 [#allocation7], 4
      %s37 = int_to_ptr.vmem [resolvable:$true] %s36
      %42 = dma.hbm_to_vmem [thread:$0]  %s2, 2048, %s37, [#allocation8], 256, 256, 16
    $region13: #{tpu_custom_call.1} parent=1 // pred_fallthru
      _
    // Predicated region
    $region14: #{tpu_custom_call.1} parent=1 // pred_check
      _
    $region15: #{tpu_custom_call.1} parent=1 // pred_check_branch
      %44 = sbr.rel (0) target = $region17
    $region16: #{tpu_custom_call.1} parent=1 // pred_region
      %s46 = ssub.s32 32, 32
      %47 = vsyncadd [#allocation8], %s46
      %s49 = sshll.u32 [#allocation9], 4
      %s50 = int_to_ptr.vmem [resolvable:$true] %s49
      %52 = dma.hbm_to_vmem [thread:$0]  %s3, 32, %s50, [#allocation8]
    $region17: #{tpu_custom_call.1} parent=1 // pred_fallthru
      _
    // Predicated region
    $region18: #{tpu_custom_call.1} parent=1 // pred_check
      _
    $region19: #{tpu_custom_call.1} parent=1 // pred_check_branch
      %54 = sbr.rel (0) target = $region21
    $region20: #{tpu_custom_call.1} parent=1 // pred_region
      _
    $region21: #{tpu_custom_call.1} parent=1 // pred_fallthru
      _
    // Predicated region
    $region22: #{tpu_custom_call.1} parent=1 // pred_check
      _
    $region23: #{tpu_custom_call.1} parent=1 // pred_check_branch
      %56 = sbr.rel (0) target = $region25
    $region24: #{tpu_custom_call.1} parent=1 // pred_region
      _
    $region25: #{tpu_custom_call.1} parent=1 // pred_fallthru
      _
    // Predicated region
    $region26: #{tpu_custom_call.1} parent=1 // pred_check
      _
    $region27: #{tpu_custom_call.1} parent=1 // pred_check_branch
      %58 = sbr.rel (0) target = $region29
    $region28: #{tpu_custom_call.1} parent=1 // pred_region
      _
    $region29: #{tpu_custom_call.1} parent=1 // pred_fallthru
      _
    // Predicated region
    $region30: #{tpu_custom_call.1} parent=1 // pred_check
      _
    $region31: #{tpu_custom_call.1} parent=1 // pred_check_branch
      %60 = sbr.rel (0) target = $region33
    $region32: #{tpu_custom_call.1} parent=1 // pred_region
      %s62 = ssub.s32 16, 16
      %63 = vsyncadd [#allocation11], %s62
      %s65 = sshll.u32 [#allocation10], 4
      %s66 = int_to_ptr.vmem [resolvable:$true] %s65
      %68 = dma.hbm_to_vmem [thread:$0]  %s7, 16, %s66, [#allocation11]
    $region33: #{tpu_custom_call.1} parent=1 // pred_fallthru
      _
    // Predicated region
    $region34: #{tpu_custom_call.1} parent=1 // pred_check
      _
    $region35: #{tpu_custom_call.1} parent=1 // pred_check_branch
      %70 = sbr.rel (0) target = $region37
    $region36: #{tpu_custom_call.1} parent=1 // pred_region
      _
    $region37: #{tpu_custom_call.1} parent=1 // pred_fallthru
      _
    // Predicated region
    $region38: #{tpu_custom_call.1} parent=1 // pred_check
      _
    $region39: #{tpu_custom_call.1} parent=1 // pred_check_branch
      %72 = sbr.rel (0) target = $region41
    $region40: #{tpu_custom_call.1} parent=1 // pred_region
      %73 = dma.done [#allocation6], 256
    $region41: #{tpu_custom_call.1} parent=1 // pred_fallthru
      _
    // Predicated region
    $region42: #{tpu_custom_call.1} parent=1 // pred_check
      _
    $region43: #{tpu_custom_call.1} parent=1 // pred_check_branch
      %75 = sbr.rel (0) target = $region45
    $region44: #{tpu_custom_call.1} parent=1 // pred_region
      %76 = dma.done [#allocation8], 2048
    $region45: #{tpu_custom_call.1} parent=1 // pred_fallthru
      _
    // Predicated region
    $region46: #{tpu_custom_call.1} parent=1 // pred_check
      _
    $region47: #{tpu_custom_call.1} parent=1 // pred_check_branch
      %78 = sbr.rel (0) target = $region49
    $region48: #{tpu_custom_call.1} parent=1 // pred_region
      %79 = dma.done [#allocation8], 32
    $region49: #{tpu_custom_call.1} parent=1 // pred_fallthru
      _
    // Predicated region
    $region50: #{tpu_custom_call.1} parent=1 // pred_check
      _
    $region51: #{tpu_custom_call.1} parent=1 // pred_check_branch
      %81 = sbr.rel (0) target = $region53
    $region52: #{tpu_custom_call.1} parent=1 // pred_region
      %82 = dma.done [#allocation11], 16
    $region53: #{tpu_custom_call.1} parent=1 // pred_fallthru
      _
    %v83 = vld [vmem:[#allocation5] sm:$0xff]
    %v84 = vld [vmem:[#allocation5 + $0x8] sm:$0xff]
    %v85 = vld [vmem:[%s1] sm:$0xff]
    %v86 = vld [vmem:[%s1 + $0x8] sm:$0xff]
    %v87 = vld [vmem:[#allocation7] sm:$0xff]
    %v88 = vld [vmem:[#allocation7 + $0x8] sm:$0xff]
    %v89 = vld [vmem:[#allocation7 + $0x10] sm:$0xff]
    %v90 = vld [vmem:[#allocation7 + $0x18] sm:$0xff]
    %v91 = vld [vmem:[#allocation7 + $0x20] sm:$0xff]
    %v92 = vld [vmem:[#allocation7 + $0x28] sm:$0xff]
    %v93 = vld [vmem:[#allocation7 + $0x30] sm:$0xff]
    %v94 = vld [vmem:[#allocation7 + $0x38] sm:$0xff]
    %v95 = vld [vmem:[#allocation7 + $0x40] sm:$0xff]
    %v96 = vld [vmem:[#allocation7 + $0x48] sm:$0xff]
    %v97 = vld [vmem:[#allocation7 + $0x50] sm:$0xff]
    %v98 = vld [vmem:[#allocation7 + $0x58] sm:$0xff]
    %v99 = vld [vmem:[#allocation7 + $0x60] sm:$0xff]
    %v100 = vld [vmem:[#allocation7 + $0x68] sm:$0xff]
    %v101 = vld [vmem:[#allocation7 + $0x70] sm:$0xff]
    %v102 = vld [vmem:[#allocation7 + $0x78] sm:$0xff]
    %v103 = vld [vmem:[#allocation9] sm:$0x3]
    %v105 = vlaneseq
    %v106 = vshrl.u32 %v105, 7
    %v107 = vsub.s32 0, %v106
    %v108 = vrot.slane %v103, %v107
    %v109 = vlaneseq
    %v110 = vshrl.u32 %v109, 7
    %v111 = vsub.s32 1, %v110
    %v112 = vrot.slane %v103, %v111
    %vm115 = vcmask 523264
    %v117 = vsel %vm115, %v83, 0
    %v120 = vsel %vm115, %v84, 0
    %122 = vmatprep.subr.mxu0 %v88
    %123 = vmatpush1.msra.mxu0 %v87
    %124 = vmatprep.subr.mxu0 %v90
    %125 = vmatpush1.msra.mxu0 %v89
    %126 = vmatprep.subr.mxu0 %v92
    %127 = vmatpush1.msra.mxu0 %v91
    %128 = vmatprep.subr.mxu0 %v94
    %129 = vmatpush1.msra.mxu0 %v93
    %130 = vmatprep.subr.mxu0 %v96
    %131 = vmatpush1.msra.mxu0 %v95
    %132 = vmatprep.subr.mxu0 %v98
    %133 = vmatpush1.msra.mxu0 %v97
    %134 = vmatprep.subr.mxu0 %v100
    %135 = vmatpush1.msra.mxu0 %v99
    %136 = vmatprep.subr.mxu0 %v102
    %137 = vmatpush1.msra.mxu0 %v101
    %138 = vmatprep.subr.mxu0 0.0
    %139 = vmatpush1.msra.mxu0 0.0
    %140 = vmatprep.subr.mxu0 0.0
    %141 = vmatpush1.msra.mxu0 0.0
    %142 = vmatprep.subr.mxu0 0.0
    %143 = vmatpush1.msra.mxu0 0.0
    %144 = vmatprep.subr.mxu0 0.0
    %145 = vmatpush1.msra.mxu0 0.0
    %146 = vmatprep.subr.mxu0 0.0
    %147 = vmatpush1.msra.mxu0 0.0
    %148 = vmatprep.subr.mxu0 0.0
    %149 = vmatpush1.msra.mxu0 0.0
    %150 = vmatprep.subr.mxu0 0.0
    %151 = vmatpush1.msra.mxu0 0.0
    %152 = vmatprep.subr.mxu0 0.0
    %153 = vmatpush1.msra.mxu0 0.0
    %154 = vmatprep.subr.mxu0 0.0
    %155 = vmatpush1.msra.mxu0 0.0
    %156 = vmatprep.subr.mxu0 0.0
    %157 = vmatpush1.msra.mxu0 0.0
    %158 = vmatprep.subr.mxu0 0.0
    %159 = vmatpush1.msra.mxu0 0.0
    %160 = vmatprep.subr.mxu0 0.0
    %161 = vmatpush1.msra.mxu0 0.0
    %162 = vmatprep.subr.mxu0 0.0
    %163 = vmatpush1.msra.mxu0 0.0
    %164 = vmatprep.subr.mxu0 0.0
    %165 = vmatpush1.msra.mxu0 0.0
    %166 = vmatprep.subr.mxu0 0.0
    %167 = vmatpush1.msra.mxu0 0.0
    %168 = vmatprep.subr.mxu0 0.0
    %169 = vmatpush1.msra.mxu0 0.0
    %170 = vmatprep.subr.mxu0 0.0
    %171 = vmatpush1.msra.mxu0 0.0
    %172 = vmatprep.subr.mxu0 0.0
    %173 = vmatpush1.msra.mxu0 0.0
    %174 = vmatprep.subr.mxu0 0.0
    %175 = vmatpush1.msra.mxu0 0.0
    %176 = vmatprep.subr.mxu0 0.0
    %177 = vmatpush1.msra.mxu0 0.0
    %178 = vmatprep.subr.mxu0 0.0
    %179 = vmatpush1.msra.mxu0 0.0
    %180 = vmatprep.subr.mxu0 0.0
    %181 = vmatpush1.msra.mxu0 0.0
    %182 = vmatprep.subr.mxu0 0.0
    %183 = vmatpush1.msra.mxu0 0.0
    %184 = vmatprep.subr.mxu0 0.0
    %185 = vmatpush1.msra.mxu0 0.0
    %186 = vmatprep.mubr.f32.mxu0 0.0
    %187 = vmatmul.mubr.f32.gmra.mrb[0].mxu0 %v117
    %v188 = vpop.f32.mrb[0].mxu0
    %v189 = vadd.f32 %v108, %v188
    %v190 = vpop.f32.mrb[0].mxu0
    %v191 = vadd.f32 %v112, %v190
    %192 = vmatprep.mubr.f32.mxu0 0.0
    %193 = vmatmul.mubr.f32.gmra.mrb[0].mxu0 %v120
    %v194 = vpop.f32.mrb[0].mxu0
    %v195 = vadd.f32 %v108, %v194
    %v196 = vpop.f32.mrb[0].mxu0
    %v197 = vadd.f32 %v112, %v196
    %198 = vdwg.mxu0
    %200 = vset.pattern.permute.xlu0 0
    %201 = vperm.xlu0 %200, %v85
    %v202 = vpop.permute.xlu0 %201
    %205 = vset.pattern.permute.xlu0 0
    %206 = vperm.xlu0 %205, %v86
    %v207 = vpop.permute.xlu0 %206
    %v209 = vmul.f32 %v202, %v189
    %v210 = vmul.f32 %v207, %v195
    %v211 = vsub.f32 1.0, %v85
    %v212 = vsub.f32 1.0, %v86
    %214 = vset.pattern.permute.xlu0 0
    %215 = vperm.xlu0 %214, %v211
    %v216 = vpop.permute.xlu0 %215
    %219 = vset.pattern.permute.xlu0 0
    %220 = vperm.xlu0 %219, %v212
    %v221 = vpop.permute.xlu0 %220
    %v223 = vmul.f32 %v216, %v189
    %v224 = vmul.f32 %v221, %v195
    %227 = vrot.lane.b32.xlu0 %v223, 64
    %v228 = vpop.permute.xlu0 %227
    %229 = vrot.lane.b32.xlu0 %v224, 64
    %v230 = vpop.permute.xlu0 %229
    %v233 = vadd.f32 %v209, %v228
    %v234 = vadd.f32 %v210, %v230
    %v235 = vxor.u32 %v233, 2147483648
    %v236 = vxor.u32 %v234, 2147483648
    %v237 = vmul.f32 %v235, 1.442695
    %v238 = vpow.pop %v237
    %v239 = vmul.f32 %v236, 1.442695
    %v240 = vpow.pop %v239
    %v241 = vadd.f32 %v238, 1.0
    %v242 = vadd.f32 %v240, 1.0
    %v243 = vrcp.pop %v241
    %v244 = vmul.f32 1.0, %v243
    %v245 = vrcp.pop %v242
    %v246 = vmul.f32 1.0, %v245
    %v247 = vtanh.pop %v233
    %v248 = vtanh.pop %v234
    %vm249 = vcmask 326912
    %v250 = vsel %vm249, %v191, -inf
    %251 = vmax.xlane.f32.xlu0 %v250
    %v252 = vpop.xlane.xlu0 %251
    %v253 = vsel %vm249, %v197, -inf
    %254 = vmax.xlane.f32.xlu0 %v253
    %v255 = vpop.xlane.xlu0 %254
    %v256 = vsub.f32 %v191, %v252
    %v257 = vsub.f32 %v197, %v255
    %v258 = vmul.f32 %v256, 1.442695
    %v259 = vpow.pop %v258
    %v260 = vmul.f32 %v257, 1.442695
    %v261 = vpow.pop %v260
    %264 = vrot.lane.b32.xlu0 %v259, 96
    %v265 = vpop.permute.xlu0 %264
    %266 = vrot.lane.b32.xlu0 %v261, 96
    %v267 = vpop.permute.xlu0 %266
    %vm270 = vcmask 64512
    %v271 = vsel %vm270, %v265, 0.0
    %272 = vadd.xlane.f32.xlu0 %v271
    %v273 = vpop.xlane.xlu0 %272
    %v274 = vsel %vm270, %v267, 0.0
    %275 = vadd.xlane.f32.xlu0 %v274
    %v276 = vpop.xlane.xlu0 %275
    %v277 = vrcp.pop %v273
    %v278 = vrcp.pop %v276
    %v279 = vmul.f32 %v259, %v277
    %v280 = vmul.f32 %v261, %v278
    %v281 = vlaneseq
    %v282 = vshrl.u32 %v281, 7
    %v283 = vsub.s32 0, %v282
    %v284 = vrot.slane %v279, %v283
    %s286 = sor.u32 256, 32
    %287 = vbcast.lane.b32.xlu0 %v284, %s286
    %v288 = vpop.permute.xlu0 %287
    %v289 = vlaneseq
    %v290 = vshrl.u32 %v289, 7
    %v291 = vsub.s32 1, %v290
    %v292 = vrot.slane %v279, %v291
    %s294 = sor.u32 256, 32
    %295 = vbcast.lane.b32.xlu0 %v292, %s294
    %v296 = vpop.permute.xlu0 %295
    %v297 = vlaneseq
    %v298 = vshrl.u32 %v297, 7
    %v299 = vsub.s32 2, %v298
    %v300 = vrot.slane %v279, %v299
    %s302 = sor.u32 256, 32
    %303 = vbcast.lane.b32.xlu0 %v300, %s302
    %v304 = vpop.permute.xlu0 %303
    %v305 = vlaneseq
    %v306 = vshrl.u32 %v305, 7
    %v307 = vsub.s32 3, %v306
    %v308 = vrot.slane %v279, %v307
    %s310 = sor.u32 256, 32
    %311 = vbcast.lane.b32.xlu0 %v308, %s310
    %v312 = vpop.permute.xlu0 %311
    %v313 = vlaneseq
    %v314 = vshrl.u32 %v313, 7
    %v315 = vsub.s32 4, %v314
    %v316 = vrot.slane %v279, %v315
    %s318 = sor.u32 256, 32
    %319 = vbcast.lane.b32.xlu0 %v316, %s318
    %v320 = vpop.permute.xlu0 %319
    %v321 = vlaneseq
    %v322 = vshrl.u32 %v321, 7
    %v323 = vsub.s32 5, %v322
    %v324 = vrot.slane %v279, %v323
    %s326 = sor.u32 256, 32
    %327 = vbcast.lane.b32.xlu0 %v324, %s326
    %v328 = vpop.permute.xlu0 %327
    %v329 = vlaneseq
    %v330 = vshrl.u32 %v329, 7
    %v331 = vsub.s32 6, %v330
    %v332 = vrot.slane %v279, %v331
    %s334 = sor.u32 256, 32
    %335 = vbcast.lane.b32.xlu0 %v332, %s334
    %v336 = vpop.permute.xlu0 %335
    %v337 = vlaneseq
    %v338 = vshrl.u32 %v337, 7
    %v339 = vsub.s32 7, %v338
    %v340 = vrot.slane %v279, %v339
    %s342 = sor.u32 256, 32
    %343 = vbcast.lane.b32.xlu0 %v340, %s342
    %v344 = vpop.permute.xlu0 %343
    %v345 = vlaneseq
    %v346 = vshrl.u32 %v345, 7
    %v347 = vsub.s32 0, %v346
    %v348 = vrot.slane %v280, %v347
    %s350 = sor.u32 256, 32
    %351 = vbcast.lane.b32.xlu0 %v348, %s350
    %v352 = vpop.permute.xlu0 %351
    %v353 = vlaneseq
    %v354 = vshrl.u32 %v353, 7
    %v355 = vsub.s32 1, %v354
    %v356 = vrot.slane %v280, %v355
    %s358 = sor.u32 256, 32
    %359 = vbcast.lane.b32.xlu0 %v356, %s358
    %v360 = vpop.permute.xlu0 %359
    %v361 = vlaneseq
    %v362 = vshrl.u32 %v361, 7
    %v363 = vsub.s32 2, %v362
    %v364 = vrot.slane %v280, %v363
    %s366 = sor.u32 256, 32
    %367 = vbcast.lane.b32.xlu0 %v364, %s366
    %v368 = vpop.permute.xlu0 %367
    %v369 = vlaneseq
    %v370 = vshrl.u32 %v369, 7
    %v371 = vsub.s32 3, %v370
    %v372 = vrot.slane %v280, %v371
    %s374 = sor.u32 256, 32
    %375 = vbcast.lane.b32.xlu0 %v372, %s374
    %v376 = vpop.permute.xlu0 %375
    %v377 = vlaneseq
    %v378 = vshrl.u32 %v377, 7
    %v379 = vsub.s32 4, %v378
    %v380 = vrot.slane %v280, %v379
    %s382 = sor.u32 256, 32
    %383 = vbcast.lane.b32.xlu0 %v380, %s382
    %v384 = vpop.permute.xlu0 %383
    %v385 = vlaneseq
    %v386 = vshrl.u32 %v385, 7
    %v387 = vsub.s32 5, %v386
    %v388 = vrot.slane %v280, %v387
    %s390 = sor.u32 256, 32
    %391 = vbcast.lane.b32.xlu0 %v388, %s390
    %v392 = vpop.permute.xlu0 %391
    %v393 = vlaneseq
    %v394 = vshrl.u32 %v393, 7
    %v395 = vsub.s32 6, %v394
    %v396 = vrot.slane %v280, %v395
    %s398 = sor.u32 256, 32
    %399 = vbcast.lane.b32.xlu0 %v396, %s398
    %v400 = vpop.permute.xlu0 %399
    %v401 = vlaneseq
    %v402 = vshrl.u32 %v401, 7
    %v403 = vsub.s32 7, %v402
    %v404 = vrot.slane %v280, %v403
    %s406 = sor.u32 256, 32
    %407 = vbcast.lane.b32.xlu0 %v404, %s406
    %v408 = vpop.permute.xlu0 %407
    %v411 = vcombine.high %v244, %v244
    %v413 = vunpack.c.l.s4 1966171168
    %v414 = vunpack.c.0.s8 %v413
    %v415 = vlaneseq
    %v416 = vshrl.u32 %v415, 7
    %v417 = vsub.s32 %v414, %v416
    %v418 = vrot.slane %v244, %v417
    %v420 = vunpack.c.l.s4 1966171168
    %v421 = vunpack.c.0.s8 %v420
    %v422 = vlaneseq
    %v423 = vshrl.u32 %v422, 7
    %v424 = vsub.s32 %v421, %v423
    %v425 = vrot.slane %v411, %v424
    %v426 = vcombine.high %v418, %v418
    %v427 = vcombine.high %v425, %v425
    %v429 = vunpack.c.l.s4 1966171168
    %v430 = vunpack.c.0.s8 %v429
    %v431 = vlaneseq
    %v432 = vshrl.u32 %v431, 7
    %v433 = vsub.s32 %v430, %v432
    %v434 = vrot.slane %v418, %v433
    %v436 = vunpack.c.l.s4 1966171168
    %v437 = vunpack.c.0.s8 %v436
    %v438 = vlaneseq
    %v439 = vshrl.u32 %v438, 7
    %v440 = vsub.s32 %v437, %v439
    %v441 = vrot.slane %v425, %v440
    %v443 = vunpack.c.l.s4 1966171168
    %v444 = vunpack.c.0.s8 %v443
    %v445 = vlaneseq
    %v446 = vshrl.u32 %v445, 7
    %v447 = vsub.s32 %v444, %v446
    %v448 = vrot.slane %v426, %v447
    %v450 = vunpack.c.l.s4 1966171168
    %v451 = vunpack.c.0.s8 %v450
    %v452 = vlaneseq
    %v453 = vshrl.u32 %v452, 7
    %v454 = vsub.s32 %v451, %v453
    %v455 = vrot.slane %v427, %v454
    %v456 = vcombine.high %v434, %v434
    %v457 = vcombine.high %v441, %v441
    %v458 = vcombine.high %v448, %v448
    %v459 = vcombine.high %v455, %v455
    %v460 = vcombine.high %v246, %v246
    %v462 = vunpack.c.l.s4 1966171168
    %v463 = vunpack.c.0.s8 %v462
    %v464 = vlaneseq
    %v465 = vshrl.u32 %v464, 7
    %v466 = vsub.s32 %v463, %v465
    %v467 = vrot.slane %v246, %v466
    %v469 = vunpack.c.l.s4 1966171168
    %v470 = vunpack.c.0.s8 %v469
    %v471 = vlaneseq
    %v472 = vshrl.u32 %v471, 7
    %v473 = vsub.s32 %v470, %v472
    %v474 = vrot.slane %v460, %v473
    %v475 = vcombine.high %v467, %v467
    %v476 = vcombine.high %v474, %v474
    %v478 = vunpack.c.l.s4 1966171168
    %v479 = vunpack.c.0.s8 %v478
    %v480 = vlaneseq
    %v481 = vshrl.u32 %v480, 7
    %v482 = vsub.s32 %v479, %v481
    %v483 = vrot.slane %v467, %v482
    %v485 = vunpack.c.l.s4 1966171168
    %v486 = vunpack.c.0.s8 %v485
    %v487 = vlaneseq
    %v488 = vshrl.u32 %v487, 7
    %v489 = vsub.s32 %v486, %v488
    %v490 = vrot.slane %v474, %v489
    %v492 = vunpack.c.l.s4 1966171168
    %v493 = vunpack.c.0.s8 %v492
    %v494 = vlaneseq
    %v495 = vshrl.u32 %v494, 7
    %v496 = vsub.s32 %v493, %v495
    %v497 = vrot.slane %v475, %v496
    %v499 = vunpack.c.l.s4 1966171168
    %v500 = vunpack.c.0.s8 %v499
    %v501 = vlaneseq
    %v502 = vshrl.u32 %v501, 7
    %v503 = vsub.s32 %v500, %v502
    %v504 = vrot.slane %v476, %v503
    %v505 = vcombine.high %v483, %v483
    %v506 = vcombine.high %v490, %v490
    %v507 = vcombine.high %v497, %v497
    %v508 = vcombine.high %v504, %v504
    %v509 = vlaneseq
    %v510 = vshrl.u32 %v509, 7
    %v511 = vsub.s32 0, %v510
    %v512 = vrot.slane %v434, %v511
    %v513 = vlaneseq
    %v514 = vshrl.u32 %v513, 7
    %v515 = vsub.s32 0, %v514
    %v516 = vrot.slane %v448, %v515
    %v517 = vlaneseq
    %v518 = vshrl.u32 %v517, 7
    %v519 = vsub.s32 0, %v518
    %v520 = vrot.slane %v456, %v519
    %v521 = vlaneseq
    %v522 = vshrl.u32 %v521, 7
    %v523 = vsub.s32 0, %v522
    %v524 = vrot.slane %v458, %v523
    %v525 = vlaneseq
    %v526 = vshrl.u32 %v525, 7
    %v527 = vsub.s32 0, %v526
    %v528 = vrot.slane %v441, %v527
    %v529 = vlaneseq
    %v530 = vshrl.u32 %v529, 7
    %v531 = vsub.s32 0, %v530
    %v532 = vrot.slane %v455, %v531
    %v533 = vlaneseq
    %v534 = vshrl.u32 %v533, 7
    %v535 = vsub.s32 0, %v534
    %v536 = vrot.slane %v457, %v535
    %v537 = vlaneseq
    %v538 = vshrl.u32 %v537, 7
    %v539 = vsub.s32 0, %v538
    %v540 = vrot.slane %v459, %v539
    %v541 = vlaneseq
    %v542 = vshrl.u32 %v541, 7
    %v543 = vsub.s32 0, %v542
    %v544 = vrot.slane %v483, %v543
    %v545 = vlaneseq
    %v546 = vshrl.u32 %v545, 7
    %v547 = vsub.s32 0, %v546
    %v548 = vrot.slane %v497, %v547
    %v549 = vlaneseq
    %v550 = vshrl.u32 %v549, 7
    %v551 = vsub.s32 0, %v550
    %v552 = vrot.slane %v505, %v551
    %v553 = vlaneseq
    %v554 = vshrl.u32 %v553, 7
    %v555 = vsub.s32 0, %v554
    %v556 = vrot.slane %v507, %v555
    %v557 = vlaneseq
    %v558 = vshrl.u32 %v557, 7
    %v559 = vsub.s32 0, %v558
    %v560 = vrot.slane %v490, %v559
    %v561 = vlaneseq
    %v562 = vshrl.u32 %v561, 7
    %v563 = vsub.s32 0, %v562
    %v564 = vrot.slane %v504, %v563
    %v565 = vlaneseq
    %v566 = vshrl.u32 %v565, 7
    %v567 = vsub.s32 0, %v566
    %v568 = vrot.slane %v506, %v567
    %v569 = vlaneseq
    %v570 = vshrl.u32 %v569, 7
    %v571 = vsub.s32 0, %v570
    %v572 = vrot.slane %v508, %v571
    %v589 = vmul.f32 %v288, %v512
    %v590 = vmul.f32 %v296, %v516
    %v591 = vmul.f32 %v304, %v520
    %v592 = vmul.f32 %v312, %v524
    %v593 = vmul.f32 %v320, %v528
    %v594 = vmul.f32 %v328, %v532
    %v595 = vmul.f32 %v336, %v536
    %v596 = vmul.f32 %v344, %v540
    %v597 = vmul.f32 %v352, %v544
    %v598 = vmul.f32 %v360, %v548
    %v599 = vmul.f32 %v368, %v552
    %v600 = vmul.f32 %v376, %v556
    %v601 = vmul.f32 %v384, %v560
    %v602 = vmul.f32 %v392, %v564
    %v603 = vmul.f32 %v400, %v568
    %v604 = vmul.f32 %v408, %v572
    %v605 = vsub.f32 1.0, %v589
    %v606 = vsub.f32 1.0, %v590
    %v607 = vsub.f32 1.0, %v591
    %v608 = vsub.f32 1.0, %v592
    %v609 = vsub.f32 1.0, %v593
    %v610 = vsub.f32 1.0, %v594
    %v611 = vsub.f32 1.0, %v595
    %v612 = vsub.f32 1.0, %v596
    %v613 = vsub.f32 1.0, %v597
    %v614 = vsub.f32 1.0, %v598
    %v615 = vsub.f32 1.0, %v599
    %v616 = vsub.f32 1.0, %v600
    %v617 = vsub.f32 1.0, %v601
    %v618 = vsub.f32 1.0, %v602
    %v619 = vsub.f32 1.0, %v603
    %v620 = vsub.f32 1.0, %v604
    %vm621 = vcmask 261120
    %622 = vst.msk [vmem:[#allocation2] sm:$0xff] %vm621, %v605
    %623 = vst.msk [vmem:[#allocation2 + $0x8] sm:$0xff] %vm621, %v606
    %624 = vst.msk [vmem:[#allocation2 + $0x10] sm:$0xff] %vm621, %v607
    %625 = vst.msk [vmem:[#allocation2 + $0x18] sm:$0xff] %vm621, %v608
    %626 = vst.msk [vmem:[#allocation2 + $0x20] sm:$0xff] %vm621, %v609
    %627 = vst.msk [vmem:[#allocation2 + $0x28] sm:$0xff] %vm621, %v610
    %628 = vst.msk [vmem:[#allocation2 + $0x30] sm:$0xff] %vm621, %v611
    %629 = vst.msk [vmem:[#allocation2 + $0x38] sm:$0xff] %vm621, %v612
    %630 = vst.msk [vmem:[#allocation2 + $0x40] sm:$0xff] %vm621, %v613
    %631 = vst.msk [vmem:[#allocation2 + $0x48] sm:$0xff] %vm621, %v614
    %632 = vst.msk [vmem:[#allocation2 + $0x50] sm:$0xff] %vm621, %v615
    %633 = vst.msk [vmem:[#allocation2 + $0x58] sm:$0xff] %vm621, %v616
    %634 = vst.msk [vmem:[#allocation2 + $0x60] sm:$0xff] %vm621, %v617
    %635 = vst.msk [vmem:[#allocation2 + $0x68] sm:$0xff] %vm621, %v618
    %636 = vst.msk [vmem:[#allocation2 + $0x70] sm:$0xff] %vm621, %v619
    %637 = vst.msk [vmem:[#allocation2 + $0x78] sm:$0xff] %vm621, %v620
    %v640 = vcombine.high %v247, %v247
    %v642 = vunpack.c.l.s4 1966171168
    %v643 = vunpack.c.0.s8 %v642
    %v644 = vlaneseq
    %v645 = vshrl.u32 %v644, 7
    %v646 = vsub.s32 %v643, %v645
    %v647 = vrot.slane %v247, %v646
    %v649 = vunpack.c.l.s4 1966171168
    %v650 = vunpack.c.0.s8 %v649
    %v651 = vlaneseq
    %v652 = vshrl.u32 %v651, 7
    %v653 = vsub.s32 %v650, %v652
    %v654 = vrot.slane %v640, %v653
    %v655 = vcombine.high %v647, %v647
    %v656 = vcombine.high %v654, %v654
    %v658 = vunpack.c.l.s4 1966171168
    %v659 = vunpack.c.0.s8 %v658
    %v660 = vlaneseq
    %v661 = vshrl.u32 %v660, 7
    %v662 = vsub.s32 %v659, %v661
    %v663 = vrot.slane %v647, %v662
    %v665 = vunpack.c.l.s4 1966171168
    %v666 = vunpack.c.0.s8 %v665
    %v667 = vlaneseq
    %v668 = vshrl.u32 %v667, 7
    %v669 = vsub.s32 %v666, %v668
    %v670 = vrot.slane %v654, %v669
    %v672 = vunpack.c.l.s4 1966171168
    %v673 = vunpack.c.0.s8 %v672
    %v674 = vlaneseq
    %v675 = vshrl.u32 %v674, 7
    %v676 = vsub.s32 %v673, %v675
    %v677 = vrot.slane %v655, %v676
    %v679 = vunpack.c.l.s4 1966171168
    %v680 = vunpack.c.0.s8 %v679
    %v681 = vlaneseq
    %v682 = vshrl.u32 %v681, 7
    %v683 = vsub.s32 %v680, %v682
    %v684 = vrot.slane %v656, %v683
    %v685 = vcombine.high %v663, %v663
    %v686 = vcombine.high %v670, %v670
    %v687 = vcombine.high %v677, %v677
    %v688 = vcombine.high %v684, %v684
    %v689 = vcombine.high %v248, %v248
    %v691 = vunpack.c.l.s4 1966171168
    %v692 = vunpack.c.0.s8 %v691
    %v693 = vlaneseq
    %v694 = vshrl.u32 %v693, 7
    %v695 = vsub.s32 %v692, %v694
    %v696 = vrot.slane %v248, %v695
    %v698 = vunpack.c.l.s4 1966171168
    %v699 = vunpack.c.0.s8 %v698
    %v700 = vlaneseq
    %v701 = vshrl.u32 %v700, 7
    %v702 = vsub.s32 %v699, %v701
    %v703 = vrot.slane %v689, %v702
    %v704 = vcombine.high %v696, %v696
    %v705 = vcombine.high %v703, %v703
    %v707 = vunpack.c.l.s4 1966171168
    %v708 = vunpack.c.0.s8 %v707
    %v709 = vlaneseq
    %v710 = vshrl.u32 %v709, 7
    %v711 = vsub.s32 %v708, %v710
    %v712 = vrot.slane %v696, %v711
    %v714 = vunpack.c.l.s4 1966171168
    %v715 = vunpack.c.0.s8 %v714
    %v716 = vlaneseq
    %v717 = vshrl.u32 %v716, 7
    %v718 = vsub.s32 %v715, %v717
    %v719 = vrot.slane %v703, %v718
    %v721 = vunpack.c.l.s4 1966171168
    %v722 = vunpack.c.0.s8 %v721
    %v723 = vlaneseq
    %v724 = vshrl.u32 %v723, 7
    %v725 = vsub.s32 %v722, %v724
    %v726 = vrot.slane %v704, %v725
    %v728 = vunpack.c.l.s4 1966171168
    %v729 = vunpack.c.0.s8 %v728
    %v730 = vlaneseq
    %v731 = vshrl.u32 %v730, 7
    %v732 = vsub.s32 %v729, %v731
    %v733 = vrot.slane %v705, %v732
    %v734 = vcombine.high %v712, %v712
    %v735 = vcombine.high %v719, %v719
    %v736 = vcombine.high %v726, %v726
    %v737 = vcombine.high %v733, %v733
    %v738 = vlaneseq
    %v739 = vshrl.u32 %v738, 7
    %v740 = vsub.s32 0, %v739
    %v741 = vrot.slane %v663, %v740
    %v742 = vlaneseq
    %v743 = vshrl.u32 %v742, 7
    %v744 = vsub.s32 0, %v743
    %v745 = vrot.slane %v677, %v744
    %v746 = vlaneseq
    %v747 = vshrl.u32 %v746, 7
    %v748 = vsub.s32 0, %v747
    %v749 = vrot.slane %v685, %v748
    %v750 = vlaneseq
    %v751 = vshrl.u32 %v750, 7
    %v752 = vsub.s32 0, %v751
    %v753 = vrot.slane %v687, %v752
    %v754 = vlaneseq
    %v755 = vshrl.u32 %v754, 7
    %v756 = vsub.s32 0, %v755
    %v757 = vrot.slane %v670, %v756
    %v758 = vlaneseq
    %v759 = vshrl.u32 %v758, 7
    %v760 = vsub.s32 0, %v759
    %v761 = vrot.slane %v684, %v760
    %v762 = vlaneseq
    %v763 = vshrl.u32 %v762, 7
    %v764 = vsub.s32 0, %v763
    %v765 = vrot.slane %v686, %v764
    %v766 = vlaneseq
    %v767 = vshrl.u32 %v766, 7
    %v768 = vsub.s32 0, %v767
    %v769 = vrot.slane %v688, %v768
    %v770 = vlaneseq
    %v771 = vshrl.u32 %v770, 7
    %v772 = vsub.s32 0, %v771
    %v773 = vrot.slane %v712, %v772
    %v774 = vlaneseq
    %v775 = vshrl.u32 %v774, 7
    %v776 = vsub.s32 0, %v775
    %v777 = vrot.slane %v726, %v776
    %v778 = vlaneseq
    %v779 = vshrl.u32 %v778, 7
    %v780 = vsub.s32 0, %v779
    %v781 = vrot.slane %v734, %v780
    %v782 = vlaneseq
    %v783 = vshrl.u32 %v782, 7
    %v784 = vsub.s32 0, %v783
    %v785 = vrot.slane %v736, %v784
    %v786 = vlaneseq
    %v787 = vshrl.u32 %v786, 7
    %v788 = vsub.s32 0, %v787
    %v789 = vrot.slane %v719, %v788
    %v790 = vlaneseq
    %v791 = vshrl.u32 %v790, 7
    %v792 = vsub.s32 0, %v791
    %v793 = vrot.slane %v733, %v792
    %v794 = vlaneseq
    %v795 = vshrl.u32 %v794, 7
    %v796 = vsub.s32 0, %v795
    %v797 = vrot.slane %v735, %v796
    %v798 = vlaneseq
    %v799 = vshrl.u32 %v798, 7
    %v800 = vsub.s32 0, %v799
    %v801 = vrot.slane %v737, %v800
    %v818 = vmul.f32 %v288, %v741
    %v819 = vmul.f32 %v296, %v745
    %v820 = vmul.f32 %v304, %v749
    %v821 = vmul.f32 %v312, %v753
    %v822 = vmul.f32 %v320, %v757
    %v823 = vmul.f32 %v328, %v761
    %v824 = vmul.f32 %v336, %v765
    %v825 = vmul.f32 %v344, %v769
    %v826 = vmul.f32 %v352, %v773
    %v827 = vmul.f32 %v360, %v777
    %v828 = vmul.f32 %v368, %v781
    %v829 = vmul.f32 %v376, %v785
    %v830 = vmul.f32 %v384, %v789
    %v831 = vmul.f32 %v392, %v793
    %v832 = vmul.f32 %v400, %v797
    %v833 = vmul.f32 %v408, %v801
    %850 = vrot.lane.b32.xlu0 %v818, 96
    %v851 = vpop.permute.xlu0 %850
    %852 = vrot.lane.b32.xlu0 %v819, 96
    %v853 = vpop.permute.xlu0 %852
    %854 = vrot.lane.b32.xlu0 %v820, 96
    %v855 = vpop.permute.xlu0 %854
    %856 = vrot.lane.b32.xlu0 %v821, 96
    %v857 = vpop.permute.xlu0 %856
    %858 = vrot.lane.b32.xlu0 %v822, 96
    %v859 = vpop.permute.xlu0 %858
    %860 = vrot.lane.b32.xlu0 %v823, 96
    %v861 = vpop.permute.xlu0 %860
    %862 = vrot.lane.b32.xlu0 %v824, 96
    %v863 = vpop.permute.xlu0 %862
    %864 = vrot.lane.b32.xlu0 %v825, 96
    %v865 = vpop.permute.xlu0 %864
    %866 = vrot.lane.b32.xlu0 %v826, 96
    %v867 = vpop.permute.xlu0 %866
    %868 = vrot.lane.b32.xlu0 %v827, 96
    %v869 = vpop.permute.xlu0 %868
    %870 = vrot.lane.b32.xlu0 %v828, 96
    %v871 = vpop.permute.xlu0 %870
    %872 = vrot.lane.b32.xlu0 %v829, 96
    %v873 = vpop.permute.xlu0 %872
    %874 = vrot.lane.b32.xlu0 %v830, 96
    %v875 = vpop.permute.xlu0 %874
    %876 = vrot.lane.b32.xlu0 %v831, 96
    %v877 = vpop.permute.xlu0 %876
    %878 = vrot.lane.b32.xlu0 %v832, 96
    %v879 = vpop.permute.xlu0 %878
    %880 = vrot.lane.b32.xlu0 %v833, 96
    %v881 = vpop.permute.xlu0 %880
    %898 = vst.msk [vmem:[#allocation3] sm:$0xff] %vm621, %v851
    %899 = vst.msk [vmem:[#allocation3 + $0x8] sm:$0xff] %vm621, %v853
    %900 = vst.msk [vmem:[#allocation3 + $0x10] sm:$0xff] %vm621, %v855
    %901 = vst.msk [vmem:[#allocation3 + $0x18] sm:$0xff] %vm621, %v857
    %902 = vst.msk [vmem:[#allocation3 + $0x20] sm:$0xff] %vm621, %v859
    %903 = vst.msk [vmem:[#allocation3 + $0x28] sm:$0xff] %vm621, %v861
    %904 = vst.msk [vmem:[#allocation3 + $0x30] sm:$0xff] %vm621, %v863
    %905 = vst.msk [vmem:[#allocation3 + $0x38] sm:$0xff] %vm621, %v865
    %906 = vst.msk [vmem:[#allocation3 + $0x40] sm:$0xff] %vm621, %v867
    %907 = vst.msk [vmem:[#allocation3 + $0x48] sm:$0xff] %vm621, %v869
    %908 = vst.msk [vmem:[#allocation3 + $0x50] sm:$0xff] %vm621, %v871
    %909 = vst.msk [vmem:[#allocation3 + $0x58] sm:$0xff] %vm621, %v873
    %910 = vst.msk [vmem:[#allocation3 + $0x60] sm:$0xff] %vm621, %v875
    %911 = vst.msk [vmem:[#allocation3 + $0x68] sm:$0xff] %vm621, %v877
    %912 = vst.msk [vmem:[#allocation3 + $0x70] sm:$0xff] %vm621, %v879
    %913 = vst.msk [vmem:[#allocation3 + $0x78] sm:$0xff] %vm621, %v881
    %v914 = vld [vmem:[%s8] sm:$0xff]
    %v915 = vmul.f32 %v288, %v914
    %v916 = vmul.f32 %v296, %v914
    %v917 = vsel %vm621, %v915, 0.0
    %v918 = vrot.slane %v917, 4
    %v919 = vadd.f32 %v917, %v918
    %v920 = vrot.slane %v919, 2
    %v921 = vadd.f32 %v919, %v920
    %v922 = vrot.slane %v921, 1
    %v923 = vadd.f32 %v921, %v922
    %v924 = vsel %vm621, %v916, 0.0
    %v925 = vrot.slane %v924, 4
    %v926 = vadd.f32 %v924, %v925
    %v927 = vrot.slane %v926, 2
    %v928 = vadd.f32 %v926, %v927
    %v929 = vrot.slane %v928, 1
    %v930 = vadd.f32 %v928, %v929
    %vm933 = vcmask 1041409
    %v934 = vsel %vm933, %v930, %v923
    %vm936 = vcmask 254976
    %937 = vst.msk [vmem:[#allocation4] sm:$0x3] %vm936, %v934
    %v938 = vld [vmem:[#allocation2] sm:$0xff]
    %v939 = vld [vmem:[#allocation2 + $0x8] sm:$0xff]
    %v940 = vmul.f32 %v914, %v938
    %v941 = vmul.f32 %v914, %v939
    %v942 = vld [vmem:[#allocation3] sm:$0xff]
    %v943 = vld [vmem:[#allocation3 + $0x8] sm:$0xff]
    %v944 = vadd.f32 %v940, %v942
    %v945 = vadd.f32 %v941, %v943
    %v946 = vmul.f32 %v304, %v944
    %v947 = vmul.f32 %v312, %v945
    %v948 = vsel %vm621, %v946, 0.0
    %v949 = vrot.slane %v948, 4
    %v950 = vadd.f32 %v948, %v949
    %v951 = vrot.slane %v950, 2
    %v952 = vadd.f32 %v950, %v951
    %v953 = vrot.slane %v952, 1
    %v954 = vadd.f32 %v952, %v953
    %v955 = vsel %vm621, %v947, 0.0
    %v956 = vrot.slane %v955, 4
    %v957 = vadd.f32 %v955, %v956
    %v958 = vrot.slane %v957, 2
    %v959 = vadd.f32 %v957, %v958
    %v960 = vrot.slane %v959, 1
    %v961 = vadd.f32 %v959, %v960
    %v964 = vsel %vm933, %v961, %v954
    %966 = vst.msk [vmem:[#allocation4 + $0x2] sm:$0x3] %vm936, %v964
    %s967 = scalar_lea.vmem [#allocation2], 16
    %v968 = vld [vmem:[%s967] sm:$0xff]
    %v969 = vld [vmem:[%s967 + $0x8] sm:$0xff]
    %v970 = vmul.f32 %v944, %v968
    %v971 = vmul.f32 %v945, %v969
    %s972 = scalar_lea.vmem [#allocation3], 16
    %v973 = vld [vmem:[%s972] sm:$0xff]
    %v974 = vld [vmem:[%s972 + $0x8] sm:$0xff]
    %v975 = vadd.f32 %v970, %v973
    %v976 = vadd.f32 %v971, %v974
    %v977 = vmul.f32 %v320, %v975
    %v978 = vmul.f32 %v328, %v976
    %v979 = vsel %vm621, %v977, 0.0
    %v980 = vrot.slane %v979, 4
    %v981 = vadd.f32 %v979, %v980
    %v982 = vrot.slane %v981, 2
    %v983 = vadd.f32 %v981, %v982
    %v984 = vrot.slane %v983, 1
    %v985 = vadd.f32 %v983, %v984
    %v986 = vsel %vm621, %v978, 0.0
    %v987 = vrot.slane %v986, 4
    %v988 = vadd.f32 %v986, %v987
    %v989 = vrot.slane %v988, 2
    %v990 = vadd.f32 %v988, %v989
    %v991 = vrot.slane %v990, 1
    %v992 = vadd.f32 %v990, %v991
    %v995 = vsel %vm933, %v992, %v985
    %997 = vst.msk [vmem:[#allocation4 + $0x4] sm:$0x3] %vm936, %v995
    %s998 = scalar_lea.vmem [#allocation2], 32
    %v999 = vld [vmem:[%s998] sm:$0xff]
    %v1000 = vld [vmem:[%s998 + $0x8] sm:$0xff]
    %v1001 = vmul.f32 %v975, %v999
    %v1002 = vmul.f32 %v976, %v1000
    %s1003 = scalar_lea.vmem [#allocation3], 32
    %v1004 = vld [vmem:[%s1003] sm:$0xff]
    %v1005 = vld [vmem:[%s1003 + $0x8] sm:$0xff]
    %v1006 = vadd.f32 %v1001, %v1004
    %v1007 = vadd.f32 %v1002, %v1005
    %v1008 = vmul.f32 %v336, %v1006
    %v1009 = vmul.f32 %v344, %v1007
    %v1010 = vsel %vm621, %v1008, 0.0
    %v1011 = vrot.slane %v1010, 4
    %v1012 = vadd.f32 %v1010, %v1011
    %v1013 = vrot.slane %v1012, 2
    %v1014 = vadd.f32 %v1012, %v1013
    %v1015 = vrot.slane %v1014, 1
    %v1016 = vadd.f32 %v1014, %v1015
    %v1017 = vsel %vm621, %v1009, 0.0
    %v1018 = vrot.slane %v1017, 4
    %v1019 = vadd.f32 %v1017, %v1018
    %v1020 = vrot.slane %v1019, 2
    %v1021 = vadd.f32 %v1019, %v1020
    %v1022 = vrot.slane %v1021, 1
    %v1023 = vadd.f32 %v1021, %v1022
    %v1026 = vsel %vm933, %v1023, %v1016
    %1028 = vst.msk [vmem:[#allocation4 + $0x6] sm:$0x3] %vm936, %v1026
    %s1029 = scalar_lea.vmem [#allocation2], 48
    %v1030 = vld [vmem:[%s1029] sm:$0xff]
    %v1031 = vld [vmem:[%s1029 + $0x8] sm:$0xff]
    %v1032 = vmul.f32 %v1006, %v1030
    %v1033 = vmul.f32 %v1007, %v1031
    %s1034 = scalar_lea.vmem [#allocation3], 48
    %v1035 = vld [vmem:[%s1034] sm:$0xff]
    %v1036 = vld [vmem:[%s1034 + $0x8] sm:$0xff]
    %v1037 = vadd.f32 %v1032, %v1035
    %v1038 = vadd.f32 %v1033, %v1036
    %v1039 = vmul.f32 %v352, %v1037
    %v1040 = vmul.f32 %v360, %v1038
    %v1041 = vsel %vm621, %v1039, 0.0
    %v1042 = vrot.slane %v1041, 4
    %v1043 = vadd.f32 %v1041, %v1042
    %v1044 = vrot.slane %v1043, 2
    %v1045 = vadd.f32 %v1043, %v1044
    %v1046 = vrot.slane %v1045, 1
    %v1047 = vadd.f32 %v1045, %v1046
    %v1048 = vsel %vm621, %v1040, 0.0
    %v1049 = vrot.slane %v1048, 4
    %v1050 = vadd.f32 %v1048, %v1049
    %v1051 = vrot.slane %v1050, 2
    %v1052 = vadd.f32 %v1050, %v1051
    %v1053 = vrot.slane %v1052, 1
    %v1054 = vadd.f32 %v1052, %v1053
    %v1057 = vsel %vm933, %v1054, %v1047
    %1059 = vst.msk [vmem:[#allocation4 + $0x8] sm:$0x3] %vm936, %v1057
    %s1060 = scalar_lea.vmem [#allocation2], 64
    %v1061 = vld [vmem:[%s1060] sm:$0xff]
    %v1062 = vld [vmem:[%s1060 + $0x8] sm:$0xff]
    %v1063 = vmul.f32 %v1037, %v1061
    %v1064 = vmul.f32 %v1038, %v1062
    %s1065 = scalar_lea.vmem [#allocation3], 64
    %v1066 = vld [vmem:[%s1065] sm:$0xff]
    %v1067 = vld [vmem:[%s1065 + $0x8] sm:$0xff]
    %v1068 = vadd.f32 %v1063, %v1066
    %v1069 = vadd.f32 %v1064, %v1067
    %v1070 = vmul.f32 %v368, %v1068
    %v1071 = vmul.f32 %v376, %v1069
    %v1072 = vsel %vm621, %v1070, 0.0
    %v1073 = vrot.slane %v1072, 4
    %v1074 = vadd.f32 %v1072, %v1073
    %v1075 = vrot.slane %v1074, 2
    %v1076 = vadd.f32 %v1074, %v1075
    %v1077 = vrot.slane %v1076, 1
    %v1078 = vadd.f32 %v1076, %v1077
    %v1079 = vsel %vm621, %v1071, 0.0
    %v1080 = vrot.slane %v1079, 4
    %v1081 = vadd.f32 %v1079, %v1080
    %v1082 = vrot.slane %v1081, 2
    %v1083 = vadd.f32 %v1081, %v1082
    %v1084 = vrot.slane %v1083, 1
    %v1085 = vadd.f32 %v1083, %v1084
    %v1088 = vsel %vm933, %v1085, %v1078
    %1090 = vst.msk [vmem:[#allocation4 + $0xa] sm:$0x3] %vm936, %v1088
    %s1091 = scalar_lea.vmem [#allocation2], 80
    %v1092 = vld [vmem:[%s1091] sm:$0xff]
    %v1093 = vld [vmem:[%s1091 + $0x8] sm:$0xff]
    %v1094 = vmul.f32 %v1068, %v1092
    %v1095 = vmul.f32 %v1069, %v1093
    %s1096 = scalar_lea.vmem [#allocation3], 80
    %v1097 = vld [vmem:[%s1096] sm:$0xff]
    %v1098 = vld [vmem:[%s1096 + $0x8] sm:$0xff]
    %v1099 = vadd.f32 %v1094, %v1097
    %v1100 = vadd.f32 %v1095, %v1098
    %v1101 = vmul.f32 %v384, %v1099
    %v1102 = vmul.f32 %v392, %v1100
    %v1103 = vsel %vm621, %v1101, 0.0
    %v1104 = vrot.slane %v1103, 4
    %v1105 = vadd.f32 %v1103, %v1104
    %v1106 = vrot.slane %v1105, 2
    %v1107 = vadd.f32 %v1105, %v1106
    %v1108 = vrot.slane %v1107, 1
    %v1109 = vadd.f32 %v1107, %v1108
    %v1110 = vsel %vm621, %v1102, 0.0
    %v1111 = vrot.slane %v1110, 4
    %v1112 = vadd.f32 %v1110, %v1111
    %v1113 = vrot.slane %v1112, 2
    %v1114 = vadd.f32 %v1112, %v1113
    %v1115 = vrot.slane %v1114, 1
    %v1116 = vadd.f32 %v1114, %v1115
    %v1119 = vsel %vm933, %v1116, %v1109
    %1121 = vst.msk [vmem:[#allocation4 + $0xc] sm:$0x3] %vm936, %v1119
    %s1122 = scalar_lea.vmem [#allocation2], 96
    %v1123 = vld [vmem:[%s1122] sm:$0xff]
    %v1124 = vld [vmem:[%s1122 + $0x8] sm:$0xff]
    %v1125 = vmul.f32 %v1099, %v1123
    %v1126 = vmul.f32 %v1100, %v1124
    %s1127 = scalar_lea.vmem [#allocation3], 96
    %v1128 = vld [vmem:[%s1127] sm:$0xff]
    %v1129 = vld [vmem:[%s1127 + $0x8] sm:$0xff]
    %v1130 = vadd.f32 %v1125, %v1128
    %v1131 = vadd.f32 %v1126, %v1129
    %v1132 = vmul.f32 %v400, %v1130
    %v1133 = vmul.f32 %v408, %v1131
    %v1134 = vsel %vm621, %v1132, 0.0
    %v1135 = vrot.slane %v1134, 4
    %v1136 = vadd.f32 %v1134, %v1135
    %v1137 = vrot.slane %v1136, 2
    %v1138 = vadd.f32 %v1136, %v1137
    %v1139 = vrot.slane %v1138, 1
    %v1140 = vadd.f32 %v1138, %v1139
    %v1141 = vsel %vm621, %v1133, 0.0
    %v1142 = vrot.slane %v1141, 4
    %v1143 = vadd.f32 %v1141, %v1142
    %v1144 = vrot.slane %v1143, 2
    %v1145 = vadd.f32 %v1143, %v1144
    %v1146 = vrot.slane %v1145, 1
    %v1147 = vadd.f32 %v1145, %v1146
    %v1150 = vsel %vm933, %v1147, %v1140
    %1152 = vst.msk [vmem:[#allocation4 + $0xe] sm:$0x3] %vm936, %v1150
    %v1153 = vld [vmem:[#allocation4] sm:$0xff]
    %v1154 = vld [vmem:[#allocation4 + $0x8] sm:$0xff]
    %v1155 = vld [vmem:[%s4] sm:$0xff]
    %v1156 = vld [vmem:[%s4 + $0x8] sm:$0xff]
    %v1157 = vld [vmem:[%s4 + $0x10] sm:$0xff]
    %v1158 = vld [vmem:[%s4 + $0x18] sm:$0xff]
    %v1159 = vld [vmem:[%s5] sm:$0x1]
    %v1161 = vlaneseq
    %v1162 = vshrl.u32 %v1161, 7
    %v1163 = vsub.s32 0, %v1162
    %v1164 = vrot.slane %v1159, %v1163
    %v1167 = vsel %vm621, %v1153, 0
    %v1170 = vsel %vm621, %v1154, 0
    %1172 = vmatprep.subr.mxu0 0.0
    %1173 = vmatpush1.msra.mxu0 %v1155
    %1174 = vmatprep.subr.mxu0 0.0
    %1175 = vmatpush1.msra.mxu0 %v1156
    %1176 = vmatprep.subr.mxu0 0.0
    %1177 = vmatpush1.msra.mxu0 %v1157
    %1178 = vmatprep.subr.mxu0 0.0
    %1179 = vmatpush1.msra.mxu0 %v1158
    %1180 = vmatprep.subr.mxu0 0.0
    %1181 = vmatpush1.msra.mxu0 0.0
    %1182 = vmatprep.subr.mxu0 0.0
    %1183 = vmatpush1.msra.mxu0 0.0
    %1184 = vmatprep.subr.mxu0 0.0
    %1185 = vmatpush1.msra.mxu0 0.0
    %1186 = vmatprep.subr.mxu0 0.0
    %1187 = vmatpush1.msra.mxu0 0.0
    %1188 = vmatprep.subr.mxu0 0.0
    %1189 = vmatpush1.msra.mxu0 0.0
    %1190 = vmatprep.subr.mxu0 0.0
    %1191 = vmatpush1.msra.mxu0 0.0
    %1192 = vmatprep.subr.mxu0 0.0
    %1193 = vmatpush1.msra.mxu0 0.0
    %1194 = vmatprep.subr.mxu0 0.0
    %1195 = vmatpush1.msra.mxu0 0.0
    %1196 = vmatprep.subr.mxu0 0.0
    %1197 = vmatpush1.msra.mxu0 0.0
    %1198 = vmatprep.subr.mxu0 0.0
    %1199 = vmatpush1.msra.mxu0 0.0
    %1200 = vmatprep.subr.mxu0 0.0
    %1201 = vmatpush1.msra.mxu0 0.0
    %1202 = vmatprep.subr.mxu0 0.0
    %1203 = vmatpush1.msra.mxu0 0.0
    %1204 = vmatprep.subr.mxu0 0.0
    %1205 = vmatpush1.msra.mxu0 0.0
    %1206 = vmatprep.subr.mxu0 0.0
    %1207 = vmatpush1.msra.mxu0 0.0
    %1208 = vmatprep.subr.mxu0 0.0
    %1209 = vmatpush1.msra.mxu0 0.0
    %1210 = vmatprep.subr.mxu0 0.0
    %1211 = vmatpush1.msra.mxu0 0.0
    %1212 = vmatprep.subr.mxu0 0.0
    %1213 = vmatpush1.msra.mxu0 0.0
    %1214 = vmatprep.subr.mxu0 0.0
    %1215 = vmatpush1.msra.mxu0 0.0
    %1216 = vmatprep.subr.mxu0 0.0
    %1217 = vmatpush1.msra.mxu0 0.0
    %1218 = vmatprep.subr.mxu0 0.0
    %1219 = vmatpush1.msra.mxu0 0.0
    %1220 = vmatprep.subr.mxu0 0.0
    %1221 = vmatpush1.msra.mxu0 0.0
    %1222 = vmatprep.subr.mxu0 0.0
    %1223 = vmatpush1.msra.mxu0 0.0
    %1224 = vmatprep.subr.mxu0 0.0
    %1225 = vmatpush1.msra.mxu0 0.0
    %1226 = vmatprep.subr.mxu0 0.0
    %1227 = vmatpush1.msra.mxu0 0.0
    %1228 = vmatprep.subr.mxu0 0.0
    %1229 = vmatpush1.msra.mxu0 0.0
    %1230 = vmatprep.subr.mxu0 0.0
    %1231 = vmatpush1.msra.mxu0 0.0
    %1232 = vmatprep.subr.mxu0 0.0
    %1233 = vmatpush1.msra.mxu0 0.0
    %1234 = vmatprep.subr.mxu0 0.0
    %1235 = vmatpush1.msra.mxu0 0.0
    %1236 = vmatprep.mubr.f32.mxu0 0.0
    %1237 = vmatmul.mubr.f32.gmra.mrb[0].mxu0 %v1167
    %v1238 = vpop.f32.mrb[0].mxu0
    %v1239 = vadd.f32 %v1164, %v1238
    %v1240 = vpop.f32.mrb[0].mxu0
    %1241 = vmatprep.mubr.f32.mxu0 0.0
    %1242 = vmatmul.mubr.f32.gmra.mrb[0].mxu0 %v1170
    %v1243 = vpop.f32.mrb[0].mxu0
    %v1244 = vadd.f32 %v1164, %v1243
    %v1245 = vpop.f32.mrb[0].mxu0
    %1246 = vdwg.mxu0
    %v1247 = vadd.f32 %v1239, %v191
    %v1248 = vadd.f32 %v1244, %v197
    %v1249 = vtanh.pop %v1247
    %v1250 = vtanh.pop %v1248
    %v1251 = vld [vmem:[%s6] sm:$0x1]
    %v1252 = vlaneseq
    %v1253 = vshrl.u32 %v1252, 7
    %v1254 = vsub.s32 0, %v1253
    %v1255 = vrot.slane %v1251, %v1254
    %v1256 = vmul.f32 %v1249, %v1255
    %v1257 = vmul.f32 %v1250, %v1255
    %v1258 = vsel %vm621, %v1256, 0.0
    %1259 = vadd.xlane.f32.xlu0 %v1258
    %v1260 = vpop.xlane.xlu0 %1259
    %v1261 = vsel %vm621, %v1257, 0.0
    %1262 = vadd.xlane.f32.xlu0 %v1261
    %v1263 = vpop.xlane.xlu0 %1262
    %v1264 = vld [vmem:[%s6 + $0x1] sm:$0x1]
    %v1265 = vlaneseq
    %v1266 = vshrl.u32 %v1265, 7
    %v1267 = vsub.s32 0, %v1266
    %v1268 = vrot.slane %v1264, %v1267
    %v1269 = vmul.f32 %v1249, %v1268
    %v1270 = vmul.f32 %v1250, %v1268
    %v1271 = vsel %vm621, %v1269, 0.0
    %1272 = vadd.xlane.f32.xlu0 %v1271
    %v1273 = vpop.xlane.xlu0 %1272
    %v1274 = vsel %vm621, %v1270, 0.0
    %1275 = vadd.xlane.f32.xlu0 %v1274
    %v1276 = vpop.xlane.xlu0 %1275
    %vm1277 = vcmask 7168
    %v1278 = vsel %vm1277, %v1260, %v1273
    %v1279 = vsel %vm1277, %v1263, %v1276
    %v1280 = vld [vmem:[#allocation10] sm:$0x1]
    %v1282 = vlaneseq
    %v1283 = vshrl.u32 %v1282, 7
    %v1284 = vsub.s32 0, %v1283
    %v1285 = vrot.slane %v1280, %v1284
    %v1287 = vadd.f32 %v1278, %v1285
    %v1288 = vadd.f32 %v1279, %v1285
    %1291 = vrot.lane.b32.xlu0 %v191, 88
    %v1292 = vpop.permute.xlu0 %1291
    %1293 = vrot.lane.b32.xlu0 %v197, 88
    %v1294 = vpop.permute.xlu0 %1293
    %v1297 = vadd.f32 %v1287, %v1292
    %v1298 = vadd.f32 %v1288, %v1294
    %1301 = vrot.lane.b32.xlu0 %v1239, 96
    %v1302 = vpop.permute.xlu0 %1301
    %1303 = vrot.lane.b32.xlu0 %v1244, 96
    %v1304 = vpop.permute.xlu0 %1303
    %v1307 = vadd.f32 %v1297, %v1302
    %v1308 = vadd.f32 %v1298, %v1304
    %v1309 = vxor.u32 %v1307, 2147483648
    %v1310 = vxor.u32 %v1308, 2147483648
    %v1311 = vmul.f32 %v1309, 1.442695
    %v1312 = vpow.pop %v1311
    %v1313 = vmul.f32 %v1310, 1.442695
    %v1314 = vpow.pop %v1313
    %v1315 = vadd.f32 %v1312, 1.0
    %v1316 = vadd.f32 %v1314, 1.0
    %v1317 = vrcp.pop %v1315
    %v1318 = vmul.f32 1.0, %v1317
    %v1319 = vrcp.pop %v1316
    %v1320 = vmul.f32 1.0, %v1319
    %v1321 = vadd.f32 %v1318, 1e-12
    %v1322 = vadd.f32 %v1320, 1e-12
    %v1323 = vlog2.pop %v1321
    %v1324 = vmul.f32 %v1323, 0.6931472
    %v1325 = vlog2.pop %v1322
    %v1326 = vmul.f32 %v1325, 0.6931472
    %v1327 = vxor.u32 %v191, 2147483648
    %v1328 = vxor.u32 %v197, 2147483648
    %v1329 = vmul.f32 %v1327, 1.442695
    %v1330 = vpow.pop %v1329
    %v1331 = vmul.f32 %v1328, 1.442695
    %v1332 = vpow.pop %v1331
    %v1333 = vadd.f32 %v1330, 1.0
    %v1334 = vadd.f32 %v1332, 1.0
    %v1335 = vrcp.pop %v1333
    %v1336 = vmul.f32 1.0, %v1335
    %v1337 = vrcp.pop %v1334
    %v1338 = vmul.f32 1.0, %v1337
    %v1339 = vadd.f32 %v1336, 1e-12
    %v1340 = vadd.f32 %v1338, 1e-12
    %v1341 = vlog2.pop %v1339
    %v1342 = vmul.f32 %v1341, 0.6931472
    %v1343 = vlog2.pop %v1340
    %v1344 = vmul.f32 %v1343, 0.6931472
    %vm1345 = vcmask 15360
    %1346 = vst.msk [vmem:[%s9] sm:$0xff] %vm1345, %v1324
    %1347 = vst.msk [vmem:[%s9 + $0x8] sm:$0xff] %vm1345, %v1326
    %1350 = vrot.lane.b32.xlu0 %v1342, 88
    %v1351 = vpop.permute.xlu0 %1350
    %1352 = vrot.lane.b32.xlu0 %v1344, 88
    %v1353 = vpop.permute.xlu0 %1352
    %vm1356 = vcmask 31760
    %1357 = vst.msk [vmem:[%s9] sm:$0xff] %vm1356, %v1351
    %1358 = vst.msk [vmem:[%s9 + $0x8] sm:$0xff] %vm1356, %v1353
    %1359 = vrot.lane.b32.xlu0 %v191, 92
    %v1360 = vpop.permute.xlu0 %1359
    %1361 = vrot.lane.b32.xlu0 %v197, 92
    %v1362 = vpop.permute.xlu0 %1361
    %vm1365 = vcmask 48160
    %1366 = vst.msk [vmem:[%s9] sm:$0xff] %vm1365, %v1360
    %1367 = vst.msk [vmem:[%s9 + $0x8] sm:$0xff] %vm1365, %v1362
    %1368 = vrot.lane.b32.xlu0 %v1239, 102
    %v1369 = vpop.permute.xlu0 %1368
    %1370 = vrot.lane.b32.xlu0 %v1244, 102
    %v1371 = vpop.permute.xlu0 %1370
    %vm1374 = vcmask 64560
    %1375 = vst.msk [vmem:[%s9] sm:$0xff] %vm1374, %v1369
    %1376 = vst.msk [vmem:[%s9 + $0x8] sm:$0xff] %vm1374, %v1371
    // Predicated region
    $region54: #{tpu_custom_call.1} parent=1 // pred_check
      _
    $region55: #{tpu_custom_call.1} parent=1 // pred_check_branch
      %1378 = sbr.rel (0) target = $region57
    $region56: #{tpu_custom_call.1} parent=1 // pred_region
      _
    $region57: #{tpu_custom_call.1} parent=1 // pred_fallthru
      _
    // Predicated region
    $region58: #{tpu_custom_call.1} parent=1 // pred_check
      _
    $region59: #{tpu_custom_call.1} parent=1 // pred_check_branch
      %1380 = sbr.rel (0) target = $region61
    $region60: #{tpu_custom_call.1} parent=1 // pred_region
      _
    $region61: #{tpu_custom_call.1} parent=1 // pred_fallthru
      _
    %1381 = vsyncpa [#allocation6], 1
    %1382 = vsyncpa [#allocation8], 1
    %1383 = vsyncpa [#allocation11], 1

</llo_original>
